<compile_context>
chip_gen: v7x
topology: tpu7x:2x2x1
jax: 0.10.0
libtpu: 0.0.40
codegen_flags: <defaults>
</compile_context>

<pallas_src>
import functools

import jax
import jax.numpy as jnp
from jax import lax
from jax.experimental import pallas as pl
from jax.experimental.pallas import tpu as pltpu

_SUBLANE = 8
_LANE = 128


# --------------------------------------------------------------------------------------
# Kernel
# --------------------------------------------------------------------------------------
def mqrnn_kernel(hist_long, hidden_size, batch_pad,
                 xh_ref, xp_ref,
                 wencp_ref, waux_ref, wihx_ref, whh_ref,
                 wencb_ref, wgh_ref, wgx_ref, bg_ref,
                 wlctx_ref, wlx_ref, bl_ref,
                 out_ref, gin_ref):
    Th, H, Bp = hist_long, hidden_size, batch_pad
    f32 = jnp.float32

    # ---------------- LSTM encoder: input-side work hoisted out of recurrence ----------
    # xh_aug columns = [x_hist (D), y_hist (1), ones (1)]; the encoder bias is folded into
    # w_enc_pad's ones-row and the y-gate + LSTM bias into w_aux, so the whole input-side
    # gate pre-activation for every history step is two lane-dense matmuls (no broadcasts,
    # no bias adds).
    xh = xh_ref[...]                                                      # [Th*Bp, D+2]
    feat_hist = jnp.tanh(jnp.dot(xh, wencp_ref[...], preferred_element_type=f32))
    gin = (jnp.dot(feat_hist, wihx_ref[...], preferred_element_type=f32)
           + jnp.dot(xh, waux_ref[...], preferred_element_type=f32))      # [Th*Bp, 4H]
    gin_ref[...] = gin    # staged in VMEM; per-step reads are sublane-aligned slices

    whh = whh_ref[...]                                                    # [H, 4H]

    # Serial recurrence: one [Bp,H]x[H,4H] MXU push + VPU/EUP gate math per step.
    # (Optional further opt: hold W_hh resident via pltpu.matmul_push_rhs/acc_lhs/pop.)
    def step(t, carry):
        h, c = carry
        row = pl.multiple_of(t * Bp, Bp)
        gates = gin_ref[pl.ds(row, Bp), :] + jnp.dot(h, whh,
                                                     preferred_element_type=f32)
        i_g = jax.nn.sigmoid(gates[:, 0:H])
        f_g = jax.nn.sigmoid(gates[:, H:2 * H])
        g_g = jnp.tanh(gates[:, 2 * H:3 * H])
        o_g = jax.nn.sigmoid(gates[:, 3 * H:4 * H])
        c = f_g * c + i_g * g_g
        h = o_g * jnp.tanh(c)
        return h, c

    h0 = jnp.zeros((Bp, H), f32)
    c0 = jnp.zeros((Bp, H), f32)
    h, _ = lax.fori_loop(0, Th, step, (h0, c0), unroll=True)
    # h == ht of the single-layer LSTM, shape [Bp, H]

    # ---------------- Decoder_MLP: whole horizon batched, no in-kernel loops ----------
    # Future-feature encoding via the block-diagonal encoder weight (bias row folded in):
    # comes out directly as [Bp, P*C] - no in-kernel reshape/concat needed.
    feat_pred = jnp.tanh(jnp.dot(xp_ref[...], wencb_ref[...],
                                 preferred_element_type=f32))             # [Bp, P*C]

    # global_mlp(concat(h, feats_flat)) as two split matmuls.
    ctx = jax.nn.sigmoid(
        jnp.dot(h, wgh_ref[...], preferred_element_type=f32)
        + jnp.dot(feat_pred, wgx_ref[...], preferred_element_type=f32)
        + bg_ref[...])                                                    # [Bp, C*(P+1)]

    # local_mlp over every horizon step collapsed into two matmuls + one lane-dense store
    # into a 128-wide, zero-padded output slab (real outputs live in [:, :P*Q]).
    out_ref[...] = (jnp.dot(ctx, wlctx_ref[...], preferred_element_type=f32)
                    + jnp.dot(feat_pred, wlx_ref[...], preferred_element_type=f32)
                    + bl_ref[...])


# --------------------------------------------------------------------------------------
# One-time weight repacking (hoisted out of the per-call path)
# --------------------------------------------------------------------------------------
def _block_diag(w, n):
    """[din, dout] -> [n*din, n*dout] block-diagonal replication of w."""
    din, dout = w.shape
    eye = jnp.eye(n, dtype=w.dtype)
    return (eye[:, None, :, None] * w[None, :, None, :]).reshape(n * din, n * dout)


def prepare_weights(params, *, input_dim, hidden_size, context_size,
                    num_quantiles, pred_long):
    D, H, C = input_dim, hidden_size, context_size
    Q, P = num_quantiles, pred_long
    f32 = jnp.float32

    w_enc, b_enc = params['w_enc'], params['b_enc']               # [D, C], [1, C]
    wih = params['w_ih']                                          # [C+1, 4H]
    wih_x, wih_y = wih[:C], wih[C:C + 1]
    blstm = params['b_lstm']                                      # [1, 4H] (b_ih + b_hh)

    # History encoder with the bias folded into the ones-row; the y-row is zero.
    w_enc_pad = jnp.concatenate([w_enc, jnp.zeros((1, C), f32), b_enc], axis=0)  # [D+2, C]
    # y-gate + LSTM bias path, driven by the same augmented history input.
    w_aux = jnp.concatenate([jnp.zeros((D, 4 * H), f32), wih_y, blstm], axis=0)  # [D+2, 4H]

    # Future-feature encoder: block-diagonal over the horizon + folded bias row, so
    # feat_pred comes out as [B, P*C] in one matmul.
    w_encb = jnp.concatenate([_block_diag(w_enc, P), jnp.tile(b_enc, (1, P))],
                             axis=0)                              # [P*D+1, P*C]

    wg, bg = params['w_glob'], params['b_glob']
    w_g_h, w_g_x = wg[:H], wg[H:]                                 # [H, .], [P*C, .]

    # local_mlp over every horizon step collapsed into two matmuls; columns are padded up
    # to a full 128-lane tile so the final store is lane-dense.
    wl, bl = params['w_loc'], params['b_loc']
    out_pad = ((P * Q + _LANE - 1) // _LANE) * _LANE
    pad_c = out_pad - P * Q
    w_l_ctx = jnp.concatenate([_block_diag(wl[:C], P),
                               jnp.tile(wl[C:2 * C], (1, P))], axis=0)    # [C*(P+1), P*Q]
    w_l_x = _block_diag(wl[2 * C:], P)                                    # [P*C, P*Q]
    b_l = jnp.tile(bl, (1, P))                                            # [1, P*Q]
    w_l_ctx = jnp.pad(w_l_ctx, ((0, 0), (0, pad_c)))
    w_l_x = jnp.pad(w_l_x, ((0, 0), (0, pad_c)))
    b_l = jnp.pad(b_l, ((0, 0), (0, pad_c)))

    return dict(w_enc_pad=w_enc_pad, w_aux=w_aux, w_ih_x=wih_x, w_hh=params['w_hh'],
                w_encb=w_encb, w_g_h=w_g_h, w_g_x=w_g_x, b_g=bg,
                w_l_ctx=w_l_ctx, w_l_x=w_l_x, b_l=b_l)


# --------------------------------------------------------------------------------------
# Forward (input layout plumbing + pallas_call)
# --------------------------------------------------------------------------------------
@functools.partial(jax.jit, static_argnames=(
    'hidden_size', 'context_size', 'num_quantiles', 'pred_long', 'hist_long'))
def mq_rnn_forward(packed, x_seq_hist, y_seq_hist, x_seq_pred, *,
                   hidden_size, context_size, num_quantiles, pred_long, hist_long):
    B, Th, D = x_seq_hist.shape
    P, C, H, Q = pred_long, context_size, hidden_size, num_quantiles
    assert Th == hist_long
    assert x_seq_pred.shape[1] == P
    f32 = jnp.float32

    # Pad batch up to the 8-sublane width so every per-step slice / MXU LHS is a clean
    # vreg view; padded rows are zero inputs and get sliced off the output.
    Bp = max(_SUBLANE, ((B + _SUBLANE - 1) // _SUBLANE) * _SUBLANE)
    pad_b = Bp - B
    xh = jnp.pad(x_seq_hist.astype(f32), ((0, pad_b), (0, 0), (0, 0)))
    yh = jnp.pad(y_seq_hist.astype(f32), ((0, pad_b), (0, 0)))
    xp = jnp.pad(x_seq_pred.astype(f32), ((0, pad_b), (0, 0), (0, 0)))

    # Augmented history input [x, y, 1], time-major so each step is a contiguous,
    # sublane-aligned block of Bp rows.
    xh_aug = jnp.concatenate([xh, yh[..., None], jnp.ones((Bp, Th, 1), f32)], axis=2)
    xh_aug = jnp.transpose(xh_aug, (1, 0, 2)).reshape(Th * Bp, D + 2)     # [Th*Bp, D+2]
    # Augmented future input [x_flat, 1].
    xp_aug = jnp.concatenate([xp.reshape(Bp, P * D), jnp.ones((Bp, 1), f32)],
                             axis=1)                                      # [Bp, P*D+1]

    out_pad = packed['b_l'].shape[1]
    kernel = functools.partial(mqrnn_kernel, Th, H, Bp)
    vmem = pl.BlockSpec(memory_space=pltpu.MemorySpace.VMEM)

    out = pl.pallas_call(
        kernel,
        out_shape=jax.ShapeDtypeStruct((Bp, out_pad), f32),
        in_specs=[vmem] * 13,
        out_specs=vmem,
        scratch_shapes=[pltpu.VMEM((Th * Bp, 4 * H), f32)],
    )(xh_aug, xp_aug,
      packed['w_enc_pad'], packed['w_aux'], packed['w_ih_x'], packed['w_hh'],
      packed['w_encb'], packed['w_g_h'], packed['w_g_x'], packed['b_g'],
      packed['w_l_ctx'], packed['w_l_x'], packed['b_l'])

    result = out[:B, :P * Q]
    # PyTorch forward overwrites hidden_bridge with result.view(...); the bridge MLP is
    # therefore dead work and intentionally not computed in the kernel.
    hidden_bridge = result
    return result, hidden_bridge


# --------------------------------------------------------------------------------------
# Parameter init (kaiming-style, biases zero) and a pure-JAX reference for checking
# --------------------------------------------------------------------------------------
def init_params(key, input_dim, hidden_size, context_size,
                num_quantiles, pred_long, bridge_size):
    C, H, P, Q, BR = context_size, hidden_size, pred_long, num_quantiles, bridge_size
    keys = jax.random.split(key, 6)

    def kaiming(k, shape, fan, gain):
        return (gain / jnp.sqrt(float(fan))) * jax.random.normal(k, shape, jnp.float32)

    g_relu = jnp.sqrt(2.0)
    g_tanh = 5.0 / 3.0
    return dict(
        w_enc=kaiming(keys[0], (input_dim, C), C, g_relu),            # linear_encoder
        b_enc=jnp.zeros((1, C), jnp.float32),
        w_ih=kaiming(keys[1], (C + 1, 4 * H), 4 * H, g_tanh),         # lstm weight_ih_l0
        w_hh=kaiming(keys[2], (H, 4 * H), 4 * H, g_tanh),             # lstm weight_hh_l0
        b_lstm=jnp.zeros((1, 4 * H), jnp.float32),                    # b_ih + b_hh (both 0)
        w_glob=kaiming(keys[3], (H + C * P, C * (P + 1)), C * (P + 1), g_relu),
        b_glob=jnp.zeros((1, C * (P + 1)), jnp.float32),
        w_loc=kaiming(keys[4], (3 * C, Q), Q, g_relu),
        b_loc=jnp.zeros((1, Q), jnp.float32),
        # Bridge weights exist in the PyTorch module but its output is discarded
        # (hidden_bridge is overwritten with result); never passed to the kernel.
        w_bridge=kaiming(keys[5], (3 * C, BR), BR, g_relu),
        b_bridge=jnp.zeros((1, BR), jnp.float32),
    )


def reference_forward(params, x_seq_hist, y_seq_hist, x_seq_pred, *,
                      hidden_size, context_size, num_quantiles, pred_long, hist_long):
    """Plain-JAX forward matching the PyTorch module (for correctness checking)."""
    C, H, P, Q = context_size, hidden_size, pred_long, num_quantiles
    B = x_seq_hist.shape[0]
    hp = jax.lax.Precision.HIGHEST
    feat_h = jnp.tanh(jnp.dot(x_seq_hist, params['w_enc'], precision=hp) + params['b_enc'])
    feat_p = jnp.tanh(jnp.dot(x_seq_pred, params['w_enc'], precision=hp) + params['b_enc'])
    wih, whh, blstm = params['w_ih'], params['w_hh'], params['b_lstm']
    h = jnp.zeros((B, H), jnp.float32)
    c = jnp.zeros((B, H), jnp.float32)
    for t in range(hist_long):
        xt = jnp.concatenate([feat_h[:, t, :], y_seq_hist[:, t:t + 1]], axis=1)
        g = jnp.dot(xt, wih, precision=hp) + jnp.dot(h, whh, precision=hp) + blstm
        i = jax.nn.sigmoid(g[:, :H])
        f = jax.nn.sigmoid(g[:, H:2 * H])
        gg = jnp.tanh(g[:, 2 * H:3 * H])
        o = jax.nn.sigmoid(g[:, 3 * H:])
        c = f * c + i * gg
        h = o * jnp.tanh(c)
    xf = feat_p.reshape(B, P * C)
    ctx = jax.nn.sigmoid(
        jnp.dot(jnp.concatenate([h, xf], axis=1), params['w_glob'], precision=hp)
        + params['b_glob'])
    ca = ctx[:, C * P:]
    outs = []
    for k in range(P):
        ck = ctx[:, k * C:(k + 1) * C]
        xk = feat_p[:, k, :]
        cak = jnp.concatenate([ck, ca, xk], axis=1)
        outs.append(jnp.dot(cak, params['w_loc'], precision=hp) + params['b_loc'])
    return jnp.stack(outs, axis=1).reshape(B, P * Q)


# --------------------------------------------------------------------------------------
if __name__ == "__main__":
    input_dim = 4
    hidden_size = 32
    context_size = 8
    num_quantiles = 3
    pred_long = 4
    hist_long = 8
    bridge_size = 16
    B = 2

    key = jax.random.PRNGKey(0)
    kp, kx1, ky, kx2 = jax.random.split(key, 4)
    params = init_params(kp, input_dim, hidden_size, context_size,
                         num_quantiles, pred_long, bridge_size)
    packed = prepare_weights(params, input_dim=input_dim, hidden_size=hidden_size,
                             context_size=context_size, num_quantiles=num_quantiles,
                             pred_long=pred_long)

    x_seq_hist = jax.random.normal(kx1, (B, hist_long, input_dim), jnp.float32)
    y_seq_hist = jax.random.normal(ky, (B, hist_long), jnp.float32)
    x_seq_pred = jax.random.normal(kx2, (B, pred_long, input_dim), jnp.float32)

    result, hidden_bridge = mq_rnn_forward(
        packed, x_seq_hist, y_seq_hist, x_seq_pred,
        hidden_size=hidden_size, context_size=context_size,
        num_quantiles=num_quantiles, pred_long=pred_long, hist_long=hist_long)
    jax.block_until_ready((result, hidden_bridge))

    assert result.shape == (B, pred_long * num_quantiles)
    assert hidden_bridge.shape == (B, pred_long * num_quantiles)
    assert bool(jnp.all(jnp.isfinite(result)))

    ref = reference_forward(
        params, x_seq_hist, y_seq_hist, x_seq_pred,
        hidden_size=hidden_size, context_size=context_size,
        num_quantiles=num_quantiles, pred_long=pred_long, hist_long=hist_long)
    jax.block_until_ready(ref)
    assert bool(jnp.allclose(result, ref, atol=5e-3, rtol=5e-3)), \
        f"max abs diff {float(jnp.max(jnp.abs(result - ref)))}"

    print("KERNEL_OK")
</pallas_src>

<mosaic_0001>
module attributes {stable_mosaic.version = 11 : i64} {
  func.func @mqrnn_kernel(%arg0: memref<64x6xf32, #tpu.memory_space<vmem>>, %arg1: memref<8x17xf32, #tpu.memory_space<vmem>>, %arg2: memref<6x8xf32, #tpu.memory_space<vmem>>, %arg3: memref<6x128xf32, #tpu.memory_space<vmem>>, %arg4: memref<8x128xf32, #tpu.memory_space<vmem>>, %arg5: memref<32x128xf32, #tpu.memory_space<vmem>>, %arg6: memref<17x32xf32, #tpu.memory_space<vmem>>, %arg7: memref<32x40xf32, #tpu.memory_space<vmem>>, %arg8: memref<32x40xf32, #tpu.memory_space<vmem>>, %arg9: memref<1x40xf32, #tpu.memory_space<vmem>>, %arg10: memref<40x128xf32, #tpu.memory_space<vmem>>, %arg11: memref<32x128xf32, #tpu.memory_space<vmem>>, %arg12: memref<1x128xf32, #tpu.memory_space<vmem>>, %arg13: memref<8x128xf32, #tpu.memory_space<vmem>>, %arg14: memref<64x128xf32, #tpu.memory_space<vmem>>) attributes {dimension_semantics = [], scalar_prefetch = 0 : i64, scratch_operands = 1 : i64, tpu.core_type = #tpu.core_type<tc>} {
    %c0 = arith.constant 0 : index
    %c0_0 = arith.constant 0 : index
    %0 = vector.load %arg0[%c0, %c0_0] : memref<64x6xf32, #tpu.memory_space<vmem>>, vector<64x6xf32>
    %c0_1 = arith.constant 0 : index
    %c0_2 = arith.constant 0 : index
    %1 = vector.load %arg2[%c0_1, %c0_2] : memref<6x8xf32, #tpu.memory_space<vmem>>, vector<6x8xf32>
    %cst = arith.constant dense<0.000000e+00> : vector<64x8xf32>
    %2 = tpu.matmul %0, %1, %cst {dimension_numbers = #tpu.dot_dimension_numbers<[1], [0], [0], [1], [0, 0, 1, 1], [], []>} : vector<64x6xf32>, vector<6x8xf32>, vector<64x8xf32> -> vector<64x8xf32>
    %3 = math.tanh %2 : vector<64x8xf32>
    %c0_3 = arith.constant 0 : index
    %c0_4 = arith.constant 0 : index
    %4 = vector.load %arg4[%c0_3, %c0_4] : memref<8x128xf32, #tpu.memory_space<vmem>>, vector<8x128xf32>
    %cst_5 = arith.constant dense<0.000000e+00> : vector<64x128xf32>
    %5 = tpu.matmul %3, %4, %cst_5 {dimension_numbers = #tpu.dot_dimension_numbers<[1], [0], [0], [1], [0, 0, 1, 1], [], []>} : vector<64x8xf32>, vector<8x128xf32>, vector<64x128xf32> -> vector<64x128xf32>
    %c0_6 = arith.constant 0 : index
    %c0_7 = arith.constant 0 : index
    %6 = vector.load %arg3[%c0_6, %c0_7] : memref<6x128xf32, #tpu.memory_space<vmem>>, vector<6x128xf32>
    %cst_8 = arith.constant dense<0.000000e+00> : vector<64x128xf32>
    %7 = tpu.matmul %0, %6, %cst_8 {dimension_numbers = #tpu.dot_dimension_numbers<[1], [0], [0], [1], [0, 0, 1, 1], [], []>} : vector<64x6xf32>, vector<6x128xf32>, vector<64x128xf32> -> vector<64x128xf32>
    %8 = arith.addf %5, %7 : vector<64x128xf32>
    %c0_9 = arith.constant 0 : index
    %c0_10 = arith.constant 0 : index
    %9 = vector.load %arg14[%c0_9, %c0_10] : memref<64x128xf32, #tpu.memory_space<vmem>>, vector<64x128xf32>
    tpu.vector_store %arg14[%c0_9, %c0_10], %8 {strides = array<i32>} : memref<64x128xf32, #tpu.memory_space<vmem>>, vector<64x128xf32>,
    %c0_11 = arith.constant 0 : index
    %c0_12 = arith.constant 0 : index
    %10 = vector.load %arg5[%c0_11, %c0_12] : memref<32x128xf32, #tpu.memory_space<vmem>>, vector<32x128xf32>
    %cst_13 = arith.constant 0.000000e+00 : f32
    %11 = vector.broadcast %cst_13 : f32 to vector<8x32xf32>
    %cst_14 = arith.constant 0.000000e+00 : f32
    %12 = vector.broadcast %cst_14 : f32 to vector<8x32xf32>
    %c0_i32 = arith.constant 0 : i32
    %c8_i32 = arith.constant 8 : i32
    %13 = arith.muli %c0_i32, %c8_i32 : i32
    %14 = tpu.assume_multiple %13, 8 : i32
    %15 = arith.index_cast %14 : i32 to index
    %c0_15 = arith.constant 0 : index
    %16 = vector.load %arg14[%15, %c0_15] : memref<64x128xf32, #tpu.memory_space<vmem>>, vector<8x128xf32>
    %cst_16 = arith.constant dense<0.000000e+00> : vector<8x128xf32>
    %17 = tpu.matmul %11, %10, %cst_16 {dimension_numbers = #tpu.dot_dimension_numbers<[1], [0], [0], [1], [0, 0, 1, 1], [], []>} : vector<8x32xf32>, vector<32x128xf32>, vector<8x128xf32> -> vector<8x128xf32>
    %18 = arith.addf %16, %17 : vector<8x128xf32>
    %19 = vector.extract_strided_slice %18 {offsets = [0, 0], sizes = [8, 32], strides = [1, 1]} : vector<8x128xf32> to vector<8x32xf32>
    %20 = arith.negf %19 : vector<8x32xf32>
    %21 = math.exp %20 : vector<8x32xf32>
    %cst_17 = arith.constant 1.000000e+00 : f32
    %22 = vector.broadcast %cst_17 : f32 to vector<8x32xf32>
    %23 = arith.addf %22, %21 : vector<8x32xf32>
    %24 = arith.divf %22, %23 : vector<8x32xf32>
    %25 = vector.extract_strided_slice %18 {offsets = [0, 32], sizes = [8, 32], strides = [1, 1]} : vector<8x128xf32> to vector<8x32xf32>
    %26 = arith.negf %25 : vector<8x32xf32>
    %27 = math.exp %26 : vector<8x32xf32>
    %cst_18 = arith.constant 1.000000e+00 : f32
    %28 = vector.broadcast %cst_18 : f32 to vector<8x32xf32>
    %29 = arith.addf %28, %27 : vector<8x32xf32>
    %30 = arith.divf %28, %29 : vector<8x32xf32>
    %31 = vector.extract_strided_slice %18 {offsets = [0, 64], sizes = [8, 32], strides = [1, 1]} : vector<8x128xf32> to vector<8x32xf32>
    %32 = math.tanh %31 : vector<8x32xf32>
    %33 = vector.extract_strided_slice %18 {offsets = [0, 96], sizes = [8, 32], strides = [1, 1]} : vector<8x128xf32> to vector<8x32xf32>
    %34 = arith.negf %33 : vector<8x32xf32>
    %35 = math.exp %34 : vector<8x32xf32>
    %cst_19 = arith.constant 1.000000e+00 : f32
    %36 = vector.broadcast %cst_19 : f32 to vector<8x32xf32>
    %37 = arith.addf %36, %35 : vector<8x32xf32>
    %38 = arith.divf %36, %37 : vector<8x32xf32>
    %39 = arith.mulf %30, %12 : vector<8x32xf32>
    %40 = arith.mulf %24, %32 : vector<8x32xf32>
    %41 = arith.addf %39, %40 : vector<8x32xf32>
    %42 = math.tanh %41 : vector<8x32xf32>
    %43 = arith.mulf %38, %42 : vector<8x32xf32>
    %c1_i32 = arith.constant 1 : i32
    %c8_i32_20 = arith.constant 8 : i32
    %44 = arith.muli %c1_i32, %c8_i32_20 : i32
    %45 = tpu.assume_multiple %44, 8 : i32
    %46 = arith.index_cast %45 : i32 to index
    %c0_21 = arith.constant 0 : index
    %47 = vector.load %arg14[%46, %c0_21] : memref<64x128xf32, #tpu.memory_space<vmem>>, vector<8x128xf32>
    %cst_22 = arith.constant dense<0.000000e+00> : vector<8x128xf32>
    %48 = tpu.matmul %43, %10, %cst_22 {dimension_numbers = #tpu.dot_dimension_numbers<[1], [0], [0], [1], [0, 0, 1, 1], [], []>} : vector<8x32xf32>, vector<32x128xf32>, vector<8x128xf32> -> vector<8x128xf32>
    %49 = arith.addf %47, %48 : vector<8x128xf32>
    %50 = vector.extract_strided_slice %49 {offsets = [0, 0], sizes = [8, 32], strides = [1, 1]} : vector<8x128xf32> to vector<8x32xf32>
    %51 = arith.negf %50 : vector<8x32xf32>
    %52 = math.exp %51 : vector<8x32xf32>
    %cst_23 = arith.constant 1.000000e+00 : f32
    %53 = vector.broadcast %cst_23 : f32 to vector<8x32xf32>
    %54 = arith.addf %53, %52 : vector<8x32xf32>
    %55 = arith.divf %53, %54 : vector<8x32xf32>
    %56 = vector.extract_strided_slice %49 {offsets = [0, 32], sizes = [8, 32], strides = [1, 1]} : vector<8x128xf32> to vector<8x32xf32>
    %57 = arith.negf %56 : vector<8x32xf32>
    %58 = math.exp %57 : vector<8x32xf32>
    %cst_24 = arith.constant 1.000000e+00 : f32
    %59 = vector.broadcast %cst_24 : f32 to vector<8x32xf32>
    %60 = arith.addf %59, %58 : vector<8x32xf32>
    %61 = arith.divf %59, %60 : vector<8x32xf32>
    %62 = vector.extract_strided_slice %49 {offsets = [0, 64], sizes = [8, 32], strides = [1, 1]} : vector<8x128xf32> to vector<8x32xf32>
    %63 = math.tanh %62 : vector<8x32xf32>
    %64 = vector.extract_strided_slice %49 {offsets = [0, 96], sizes = [8, 32], strides = [1, 1]} : vector<8x128xf32> to vector<8x32xf32>
    %65 = arith.negf %64 : vector<8x32xf32>
    %66 = math.exp %65 : vector<8x32xf32>
    %cst_25 = arith.constant 1.000000e+00 : f32
    %67 = vector.broadcast %cst_25 : f32 to vector<8x32xf32>
    %68 = arith.addf %67, %66 : vector<8x32xf32>
    %69 = arith.divf %67, %68 : vector<8x32xf32>
    %70 = arith.mulf %61, %41 : vector<8x32xf32>
    %71 = arith.mulf %55, %63 : vector<8x32xf32>
    %72 = arith.addf %70, %71 : vector<8x32xf32>
    %73 = math.tanh %72 : vector<8x32xf32>
    %74 = arith.mulf %69, %73 : vector<8x32xf32>
    %c2_i32 = arith.constant 2 : i32
    %c8_i32_26 = arith.constant 8 : i32
    %75 = arith.muli %c2_i32, %c8_i32_26 : i32
    %76 = tpu.assume_multiple %75, 8 : i32
    %77 = arith.index_cast %76 : i32 to index
    %c0_27 = arith.constant 0 : index
    %78 = vector.load %arg14[%77, %c0_27] : memref<64x128xf32, #tpu.memory_space<vmem>>, vector<8x128xf32>
    %cst_28 = arith.constant dense<0.000000e+00> : vector<8x128xf32>
    %79 = tpu.matmul %74, %10, %cst_28 {dimension_numbers = #tpu.dot_dimension_numbers<[1], [0], [0], [1], [0, 0, 1, 1], [], []>} : vector<8x32xf32>, vector<32x128xf32>, vector<8x128xf32> -> vector<8x128xf32>
    %80 = arith.addf %78, %79 : vector<8x128xf32>
    %81 = vector.extract_strided_slice %80 {offsets = [0, 0], sizes = [8, 32], strides = [1, 1]} : vector<8x128xf32> to vector<8x32xf32>
    %82 = arith.negf %81 : vector<8x32xf32>
    %83 = math.exp %82 : vector<8x32xf32>
    %cst_29 = arith.constant 1.000000e+00 : f32
    %84 = vector.broadcast %cst_29 : f32 to vector<8x32xf32>
    %85 = arith.addf %84, %83 : vector<8x32xf32>
    %86 = arith.divf %84, %85 : vector<8x32xf32>
    %87 = vector.extract_strided_slice %80 {offsets = [0, 32], sizes = [8, 32], strides = [1, 1]} : vector<8x128xf32> to vector<8x32xf32>
    %88 = arith.negf %87 : vector<8x32xf32>
    %89 = math.exp %88 : vector<8x32xf32>
    %cst_30 = arith.constant 1.000000e+00 : f32
    %90 = vector.broadcast %cst_30 : f32 to vector<8x32xf32>
    %91 = arith.addf %90, %89 : vector<8x32xf32>
    %92 = arith.divf %90, %91 : vector<8x32xf32>
    %93 = vector.extract_strided_slice %80 {offsets = [0, 64], sizes = [8, 32], strides = [1, 1]} : vector<8x128xf32> to vector<8x32xf32>
    %94 = math.tanh %93 : vector<8x32xf32>
    %95 = vector.extract_strided_slice %80 {offsets = [0, 96], sizes = [8, 32], strides = [1, 1]} : vector<8x128xf32> to vector<8x32xf32>
    %96 = arith.negf %95 : vector<8x32xf32>
    %97 = math.exp %96 : vector<8x32xf32>
    %cst_31 = arith.constant 1.000000e+00 : f32
    %98 = vector.broadcast %cst_31 : f32 to vector<8x32xf32>
    %99 = arith.addf %98, %97 : vector<8x32xf32>
    %100 = arith.divf %98, %99 : vector<8x32xf32>
    %101 = arith.mulf %92, %72 : vector<8x32xf32>
    %102 = arith.mulf %86, %94 : vector<8x32xf32>
    %103 = arith.addf %101, %102 : vector<8x32xf32>
    %104 = math.tanh %103 : vector<8x32xf32>
    %105 = arith.mulf %100, %104 : vector<8x32xf32>
    %c3_i32 = arith.constant 3 : i32
    %c8_i32_32 = arith.constant 8 : i32
    %106 = arith.muli %c3_i32, %c8_i32_32 : i32
    %107 = tpu.assume_multiple %106, 8 : i32
    %108 = arith.index_cast %107 : i32 to index
    %c0_33 = arith.constant 0 : index
    %109 = vector.load %arg14[%108, %c0_33] : memref<64x128xf32, #tpu.memory_space<vmem>>, vector<8x128xf32>
    %cst_34 = arith.constant dense<0.000000e+00> : vector<8x128xf32>
    %110 = tpu.matmul %105, %10, %cst_34 {dimension_numbers = #tpu.dot_dimension_numbers<[1], [0], [0], [1], [0, 0, 1, 1], [], []>} : vector<8x32xf32>, vector<32x128xf32>, vector<8x128xf32> -> vector<8x128xf32>
    %111 = arith.addf %109, %110 : vector<8x128xf32>
    %112 = vector.extract_strided_slice %111 {offsets = [0, 0], sizes = [8, 32], strides = [1, 1]} : vector<8x128xf32> to vector<8x32xf32>
    %113 = arith.negf %112 : vector<8x32xf32>
    %114 = math.exp %113 : vector<8x32xf32>
    %cst_35 = arith.constant 1.000000e+00 : f32
    %115 = vector.broadcast %cst_35 : f32 to vector<8x32xf32>
    %116 = arith.addf %115, %114 : vector<8x32xf32>
    %117 = arith.divf %115, %116 : vector<8x32xf32>
    %118 = vector.extract_strided_slice %111 {offsets = [0, 32], sizes = [8, 32], strides = [1, 1]} : vector<8x128xf32> to vector<8x32xf32>
    %119 = arith.negf %118 : vector<8x32xf32>
    %120 = math.exp %119 : vector<8x32xf32>
    %cst_36 = arith.constant 1.000000e+00 : f32
    %121 = vector.broadcast %cst_36 : f32 to vector<8x32xf32>
    %122 = arith.addf %121, %120 : vector<8x32xf32>
    %123 = arith.divf %121, %122 : vector<8x32xf32>
    %124 = vector.extract_strided_slice %111 {offsets = [0, 64], sizes = [8, 32], strides = [1, 1]} : vector<8x128xf32> to vector<8x32xf32>
    %125 = math.tanh %124 : vector<8x32xf32>
    %126 = vector.extract_strided_slice %111 {offsets = [0, 96], sizes = [8, 32], strides = [1, 1]} : vector<8x128xf32> to vector<8x32xf32>
    %127 = arith.negf %126 : vector<8x32xf32>
    %128 = math.exp %127 : vector<8x32xf32>
    %cst_37 = arith.constant 1.000000e+00 : f32
    %129 = vector.broadcast %cst_37 : f32 to vector<8x32xf32>
    %130 = arith.addf %129, %128 : vector<8x32xf32>
    %131 = arith.divf %129, %130 : vector<8x32xf32>
    %132 = arith.mulf %123, %103 : vector<8x32xf32>
    %133 = arith.mulf %117, %125 : vector<8x32xf32>
    %134 = arith.addf %132, %133 : vector<8x32xf32>
    %135 = math.tanh %134 : vector<8x32xf32>
    %136 = arith.mulf %131, %135 : vector<8x32xf32>
    %c4_i32 = arith.constant 4 : i32
    %c8_i32_38 = arith.constant 8 : i32
    %137 = arith.muli %c4_i32, %c8_i32_38 : i32
    %138 = tpu.assume_multiple %137, 8 : i32
    %139 = arith.index_cast %138 : i32 to index
    %c0_39 = arith.constant 0 : index
    %140 = vector.load %arg14[%139, %c0_39] : memref<64x128xf32, #tpu.memory_space<vmem>>, vector<8x128xf32>
    %cst_40 = arith.constant dense<0.000000e+00> : vector<8x128xf32>
    %141 = tpu.matmul %136, %10, %cst_40 {dimension_numbers = #tpu.dot_dimension_numbers<[1], [0], [0], [1], [0, 0, 1, 1], [], []>} : vector<8x32xf32>, vector<32x128xf32>, vector<8x128xf32> -> vector<8x128xf32>
    %142 = arith.addf %140, %141 : vector<8x128xf32>
    %143 = vector.extract_strided_slice %142 {offsets = [0, 0], sizes = [8, 32], strides = [1, 1]} : vector<8x128xf32> to vector<8x32xf32>
    %144 = arith.negf %143 : vector<8x32xf32>
    %145 = math.exp %144 : vector<8x32xf32>
    %cst_41 = arith.constant 1.000000e+00 : f32
    %146 = vector.broadcast %cst_41 : f32 to vector<8x32xf32>
    %147 = arith.addf %146, %145 : vector<8x32xf32>
    %148 = arith.divf %146, %147 : vector<8x32xf32>
    %149 = vector.extract_strided_slice %142 {offsets = [0, 32], sizes = [8, 32], strides = [1, 1]} : vector<8x128xf32> to vector<8x32xf32>
    %150 = arith.negf %149 : vector<8x32xf32>
    %151 = math.exp %150 : vector<8x32xf32>
    %cst_42 = arith.constant 1.000000e+00 : f32
    %152 = vector.broadcast %cst_42 : f32 to vector<8x32xf32>
    %153 = arith.addf %152, %151 : vector<8x32xf32>
    %154 = arith.divf %152, %153 : vector<8x32xf32>
    %155 = vector.extract_strided_slice %142 {offsets = [0, 64], sizes = [8, 32], strides = [1, 1]} : vector<8x128xf32> to vector<8x32xf32>
    %156 = math.tanh %155 : vector<8x32xf32>
    %157 = vector.extract_strided_slice %142 {offsets = [0, 96], sizes = [8, 32], strides = [1, 1]} : vector<8x128xf32> to vector<8x32xf32>
    %158 = arith.negf %157 : vector<8x32xf32>
    %159 = math.exp %158 : vector<8x32xf32>
    %cst_43 = arith.constant 1.000000e+00 : f32
    %160 = vector.broadcast %cst_43 : f32 to vector<8x32xf32>
    %161 = arith.addf %160, %159 : vector<8x32xf32>
    %162 = arith.divf %160, %161 : vector<8x32xf32>
    %163 = arith.mulf %154, %134 : vector<8x32xf32>
    %164 = arith.mulf %148, %156 : vector<8x32xf32>
    %165 = arith.addf %163, %164 : vector<8x32xf32>
    %166 = math.tanh %165 : vector<8x32xf32>
    %167 = arith.mulf %162, %166 : vector<8x32xf32>
    %c5_i32 = arith.constant 5 : i32
    %c8_i32_44 = arith.constant 8 : i32
    %168 = arith.muli %c5_i32, %c8_i32_44 : i32
    %169 = tpu.assume_multiple %168, 8 : i32
    %170 = arith.index_cast %169 : i32 to index
    %c0_45 = arith.constant 0 : index
    %171 = vector.load %arg14[%170, %c0_45] : memref<64x128xf32, #tpu.memory_space<vmem>>, vector<8x128xf32>
    %cst_46 = arith.constant dense<0.000000e+00> : vector<8x128xf32>
    %172 = tpu.matmul %167, %10, %cst_46 {dimension_numbers = #tpu.dot_dimension_numbers<[1], [0], [0], [1], [0, 0, 1, 1], [], []>} : vector<8x32xf32>, vector<32x128xf32>, vector<8x128xf32> -> vector<8x128xf32>
    %173 = arith.addf %171, %172 : vector<8x128xf32>
    %174 = vector.extract_strided_slice %173 {offsets = [0, 0], sizes = [8, 32], strides = [1, 1]} : vector<8x128xf32> to vector<8x32xf32>
    %175 = arith.negf %174 : vector<8x32xf32>
    %176 = math.exp %175 : vector<8x32xf32>
    %cst_47 = arith.constant 1.000000e+00 : f32
    %177 = vector.broadcast %cst_47 : f32 to vector<8x32xf32>
    %178 = arith.addf %177, %176 : vector<8x32xf32>
    %179 = arith.divf %177, %178 : vector<8x32xf32>
    %180 = vector.extract_strided_slice %173 {offsets = [0, 32], sizes = [8, 32], strides = [1, 1]} : vector<8x128xf32> to vector<8x32xf32>
    %181 = arith.negf %180 : vector<8x32xf32>
    %182 = math.exp %181 : vector<8x32xf32>
    %cst_48 = arith.constant 1.000000e+00 : f32
    %183 = vector.broadcast %cst_48 : f32 to vector<8x32xf32>
    %184 = arith.addf %183, %182 : vector<8x32xf32>
    %185 = arith.divf %183, %184 : vector<8x32xf32>
    %186 = vector.extract_strided_slice %173 {offsets = [0, 64], sizes = [8, 32], strides = [1, 1]} : vector<8x128xf32> to vector<8x32xf32>
    %187 = math.tanh %186 : vector<8x32xf32>
    %188 = vector.extract_strided_slice %173 {offsets = [0, 96], sizes = [8, 32], strides = [1, 1]} : vector<8x128xf32> to vector<8x32xf32>
    %189 = arith.negf %188 : vector<8x32xf32>
    %190 = math.exp %189 : vector<8x32xf32>
    %cst_49 = arith.constant 1.000000e+00 : f32
    %191 = vector.broadcast %cst_49 : f32 to vector<8x32xf32>
    %192 = arith.addf %191, %190 : vector<8x32xf32>
    %193 = arith.divf %191, %192 : vector<8x32xf32>
    %194 = arith.mulf %185, %165 : vector<8x32xf32>
    %195 = arith.mulf %179, %187 : vector<8x32xf32>
    %196 = arith.addf %194, %195 : vector<8x32xf32>
    %197 = math.tanh %196 : vector<8x32xf32>
    %198 = arith.mulf %193, %197 : vector<8x32xf32>
    %c6_i32 = arith.constant 6 : i32
    %c8_i32_50 = arith.constant 8 : i32
    %199 = arith.muli %c6_i32, %c8_i32_50 : i32
    %200 = tpu.assume_multiple %199, 8 : i32
    %201 = arith.index_cast %200 : i32 to index
    %c0_51 = arith.constant 0 : index
    %202 = vector.load %arg14[%201, %c0_51] : memref<64x128xf32, #tpu.memory_space<vmem>>, vector<8x128xf32>
    %cst_52 = arith.constant dense<0.000000e+00> : vector<8x128xf32>
    %203 = tpu.matmul %198, %10, %cst_52 {dimension_numbers = #tpu.dot_dimension_numbers<[1], [0], [0], [1], [0, 0, 1, 1], [], []>} : vector<8x32xf32>, vector<32x128xf32>, vector<8x128xf32> -> vector<8x128xf32>
    %204 = arith.addf %202, %203 : vector<8x128xf32>
    %205 = vector.extract_strided_slice %204 {offsets = [0, 0], sizes = [8, 32], strides = [1, 1]} : vector<8x128xf32> to vector<8x32xf32>
    %206 = arith.negf %205 : vector<8x32xf32>
    %207 = math.exp %206 : vector<8x32xf32>
    %cst_53 = arith.constant 1.000000e+00 : f32
    %208 = vector.broadcast %cst_53 : f32 to vector<8x32xf32>
    %209 = arith.addf %208, %207 : vector<8x32xf32>
    %210 = arith.divf %208, %209 : vector<8x32xf32>
    %211 = vector.extract_strided_slice %204 {offsets = [0, 32], sizes = [8, 32], strides = [1, 1]} : vector<8x128xf32> to vector<8x32xf32>
    %212 = arith.negf %211 : vector<8x32xf32>
    %213 = math.exp %212 : vector<8x32xf32>
    %cst_54 = arith.constant 1.000000e+00 : f32
    %214 = vector.broadcast %cst_54 : f32 to vector<8x32xf32>
    %215 = arith.addf %214, %213 : vector<8x32xf32>
    %216 = arith.divf %214, %215 : vector<8x32xf32>
    %217 = vector.extract_strided_slice %204 {offsets = [0, 64], sizes = [8, 32], strides = [1, 1]} : vector<8x128xf32> to vector<8x32xf32>
    %218 = math.tanh %217 : vector<8x32xf32>
    %219 = vector.extract_strided_slice %204 {offsets = [0, 96], sizes = [8, 32], strides = [1, 1]} : vector<8x128xf32> to vector<8x32xf32>
    %220 = arith.negf %219 : vector<8x32xf32>
    %221 = math.exp %220 : vector<8x32xf32>
    %cst_55 = arith.constant 1.000000e+00 : f32
    %222 = vector.broadcast %cst_55 : f32 to vector<8x32xf32>
    %223 = arith.addf %222, %221 : vector<8x32xf32>
    %224 = arith.divf %222, %223 : vector<8x32xf32>
    %225 = arith.mulf %216, %196 : vector<8x32xf32>
    %226 = arith.mulf %210, %218 : vector<8x32xf32>
    %227 = arith.addf %225, %226 : vector<8x32xf32>
    %228 = math.tanh %227 : vector<8x32xf32>
    %229 = arith.mulf %224, %228 : vector<8x32xf32>
    %c7_i32 = arith.constant 7 : i32
    %c8_i32_56 = arith.constant 8 : i32
    %230 = arith.muli %c7_i32, %c8_i32_56 : i32
    %231 = tpu.assume_multiple %230, 8 : i32
    %232 = arith.index_cast %231 : i32 to index
    %c0_57 = arith.constant 0 : index
    %233 = vector.load %arg14[%232, %c0_57] : memref<64x128xf32, #tpu.memory_space<vmem>>, vector<8x128xf32>
    %cst_58 = arith.constant dense<0.000000e+00> : vector<8x128xf32>
    %234 = tpu.matmul %229, %10, %cst_58 {dimension_numbers = #tpu.dot_dimension_numbers<[1], [0], [0], [1], [0, 0, 1, 1], [], []>} : vector<8x32xf32>, vector<32x128xf32>, vector<8x128xf32> -> vector<8x128xf32>
    %235 = arith.addf %233, %234 : vector<8x128xf32>
    %236 = vector.extract_strided_slice %235 {offsets = [0, 0], sizes = [8, 32], strides = [1, 1]} : vector<8x128xf32> to vector<8x32xf32>
    %237 = arith.negf %236 : vector<8x32xf32>
    %238 = math.exp %237 : vector<8x32xf32>
    %cst_59 = arith.constant 1.000000e+00 : f32
    %239 = vector.broadcast %cst_59 : f32 to vector<8x32xf32>
    %240 = arith.addf %239, %238 : vector<8x32xf32>
    %241 = arith.divf %239, %240 : vector<8x32xf32>
    %242 = vector.extract_strided_slice %235 {offsets = [0, 32], sizes = [8, 32], strides = [1, 1]} : vector<8x128xf32> to vector<8x32xf32>
    %243 = arith.negf %242 : vector<8x32xf32>
    %244 = math.exp %243 : vector<8x32xf32>
    %cst_60 = arith.constant 1.000000e+00 : f32
    %245 = vector.broadcast %cst_60 : f32 to vector<8x32xf32>
    %246 = arith.addf %245, %244 : vector<8x32xf32>
    %247 = arith.divf %245, %246 : vector<8x32xf32>
    %248 = vector.extract_strided_slice %235 {offsets = [0, 64], sizes = [8, 32], strides = [1, 1]} : vector<8x128xf32> to vector<8x32xf32>
    %249 = math.tanh %248 : vector<8x32xf32>
    %250 = vector.extract_strided_slice %235 {offsets = [0, 96], sizes = [8, 32], strides = [1, 1]} : vector<8x128xf32> to vector<8x32xf32>
    %251 = arith.negf %250 : vector<8x32xf32>
    %252 = math.exp %251 : vector<8x32xf32>
    %cst_61 = arith.constant 1.000000e+00 : f32
    %253 = vector.broadcast %cst_61 : f32 to vector<8x32xf32>
    %254 = arith.addf %253, %252 : vector<8x32xf32>
    %255 = arith.divf %253, %254 : vector<8x32xf32>
    %256 = arith.mulf %247, %227 : vector<8x32xf32>
    %257 = arith.mulf %241, %249 : vector<8x32xf32>
    %258 = arith.addf %256, %257 : vector<8x32xf32>
    %259 = math.tanh %258 : vector<8x32xf32>
    %260 = arith.mulf %255, %259 : vector<8x32xf32>
    %c8_i32_62 = arith.constant 8 : i32
    %c0_63 = arith.constant 0 : index
    %c0_64 = arith.constant 0 : index
    %261 = vector.load %arg1[%c0_63, %c0_64] : memref<8x17xf32, #tpu.memory_space<vmem>>, vector<8x17xf32>
    %c0_65 = arith.constant 0 : index
    %c0_66 = arith.constant 0 : index
    %262 = vector.load %arg6[%c0_65, %c0_66] : memref<17x32xf32, #tpu.memory_space<vmem>>, vector<17x32xf32>
    %cst_67 = arith.constant dense<0.000000e+00> : vector<8x32xf32>
    %263 = tpu.matmul %261, %262, %cst_67 {dimension_numbers = #tpu.dot_dimension_numbers<[1], [0], [0], [1], [0, 0, 1, 1], [], []>} : vector<8x17xf32>, vector<17x32xf32>, vector<8x32xf32> -> vector<8x32xf32>
    %264 = math.tanh %263 : vector<8x32xf32>
    %c0_68 = arith.constant 0 : index
    %c0_69 = arith.constant 0 : index
    %265 = vector.load %arg7[%c0_68, %c0_69] : memref<32x40xf32, #tpu.memory_space<vmem>>, vector<32x40xf32>
    %cst_70 = arith.constant dense<0.000000e+00> : vector<8x40xf32>
    %266 = tpu.matmul %260, %265, %cst_70 {dimension_numbers = #tpu.dot_dimension_numbers<[1], [0], [0], [1], [0, 0, 1, 1], [], []>} : vector<8x32xf32>, vector<32x40xf32>, vector<8x40xf32> -> vector<8x40xf32>
    %c0_71 = arith.constant 0 : index
    %c0_72 = arith.constant 0 : index
    %267 = vector.load %arg8[%c0_71, %c0_72] : memref<32x40xf32, #tpu.memory_space<vmem>>, vector<32x40xf32>
    %cst_73 = arith.constant dense<0.000000e+00> : vector<8x40xf32>
    %268 = tpu.matmul %264, %267, %cst_73 {dimension_numbers = #tpu.dot_dimension_numbers<[1], [0], [0], [1], [0, 0, 1, 1], [], []>} : vector<8x32xf32>, vector<32x40xf32>, vector<8x40xf32> -> vector<8x40xf32>
    %269 = arith.addf %266, %268 : vector<8x40xf32>
    %c0_74 = arith.constant 0 : index
    %c0_75 = arith.constant 0 : index
    %270 = vector.load %arg9[%c0_74, %c0_75] : memref<1x40xf32, #tpu.memory_space<vmem>>, vector<1x40xf32>
    %271 = vector.broadcast %270 : vector<1x40xf32> to vector<8x40xf32>
    %272 = arith.addf %269, %271 : vector<8x40xf32>
    %273 = arith.negf %272 : vector<8x40xf32>
    %274 = math.exp %273 : vector<8x40xf32>
    %cst_76 = arith.constant 1.000000e+00 : f32
    %275 = vector.broadcast %cst_76 : f32 to vector<8x40xf32>
    %276 = arith.addf %275, %274 : vector<8x40xf32>
    %277 = arith.divf %275, %276 : vector<8x40xf32>
    %c0_77 = arith.constant 0 : index
    %c0_78 = arith.constant 0 : index
    %278 = vector.load %arg10[%c0_77, %c0_78] : memref<40x128xf32, #tpu.memory_space<vmem>>, vector<40x128xf32>
    %cst_79 = arith.constant dense<0.000000e+00> : vector<8x128xf32>
    %279 = tpu.matmul %277, %278, %cst_79 {dimension_numbers = #tpu.dot_dimension_numbers<[1], [0], [0], [1], [0, 0, 1, 1], [], []>} : vector<8x40xf32>, vector<40x128xf32>, vector<8x128xf32> -> vector<8x128xf32>
    %c0_80 = arith.constant 0 : index
    %c0_81 = arith.constant 0 : index
    %280 = vector.load %arg11[%c0_80, %c0_81] : memref<32x128xf32, #tpu.memory_space<vmem>>, vector<32x128xf32>
    %cst_82 = arith.constant dense<0.000000e+00> : vector<8x128xf32>
    %281 = tpu.matmul %264, %280, %cst_82 {dimension_numbers = #tpu.dot_dimension_numbers<[1], [0], [0], [1], [0, 0, 1, 1], [], []>} : vector<8x32xf32>, vector<32x128xf32>, vector<8x128xf32> -> vector<8x128xf32>
    %282 = arith.addf %279, %281 : vector<8x128xf32>
    %c0_83 = arith.constant 0 : index
    %c0_84 = arith.constant 0 : index
    %283 = vector.load %arg12[%c0_83, %c0_84] : memref<1x128xf32, #tpu.memory_space<vmem>>, vector<1x128xf32>
    %284 = vector.broadcast %283 : vector<1x128xf32> to vector<8x128xf32>
    %285 = arith.addf %282, %284 : vector<8x128xf32>
    %c0_85 = arith.constant 0 : index
    %c0_86 = arith.constant 0 : index
    %286 = vector.load %arg13[%c0_85, %c0_86] : memref<8x128xf32, #tpu.memory_space<vmem>>, vector<8x128xf32>
    tpu.vector_store %arg13[%c0_85, %c0_86], %285 {strides = array<i32>} : memref<8x128xf32, #tpu.memory_space<vmem>>, vector<8x128xf32>,
    return
  }
}

</mosaic_0001>

<llo_original>
// kernel: mq_rnn_forward.1
$region0: #{mq_rnn_forward.1}
  #allocation0 [shape = 'u32[]', space=smem, size = 0x4, offset = 0x4, fixed_abs, tag = 'smem constant byte address 0x4 - core index']
  #allocation1 [shape = 'u32[144,128]{1,0:T(1,128)}', space=vmem, size = 0x12000, scoped, tag = 'internal scratch']
  #allocation2 [shape = 'f32[64,128]{1,0:T(8,128)}', space=vmem, size = 0x8000, scoped, tag = 'scratch operand']
  %s0 = inlined_call_operand.vmem [shape: f32[64,6], index: 0, kind: input, shape index: {}]
  %s1 = inlined_call_operand.vmem [shape: f32[8,17], index: 1, kind: input, shape index: {}]
  %s2 = inlined_call_operand.vmem [shape: f32[6,8], index: 2, kind: input, shape index: {}]
  %s3 = inlined_call_operand.vmem [shape: f32[6,128], index: 3, kind: input, shape index: {}]
  %s4 = inlined_call_operand.vmem [shape: f32[8,128], index: 4, kind: input, shape index: {}]
  %s5 = inlined_call_operand.vmem [shape: f32[32,128], index: 5, kind: input, shape index: {}]
  %s6 = inlined_call_operand.vmem [shape: f32[17,32], index: 6, kind: input, shape index: {}]
  %s7 = inlined_call_operand.vmem [shape: f32[32,40], index: 7, kind: input, shape index: {}]
  %s8 = inlined_call_operand.vmem [shape: f32[32,40], index: 8, kind: input, shape index: {}]
  %s9 = inlined_call_operand.vmem [shape: f32[1,40], index: 9, kind: input, shape index: {}]
  %s10 = inlined_call_operand.vmem [shape: f32[40,128], index: 10, kind: input, shape index: {}]
  %s11 = inlined_call_operand.vmem [shape: f32[32,128], index: 11, kind: input, shape index: {}]
  %s12 = inlined_call_operand.vmem [shape: f32[1,128], index: 12, kind: input, shape index: {}]
  %s13 = inlined_call_operand.vmem [shape: f32[8,128], index: 13, kind: output, shape index: {}]
  %s14 = sld [smem:[#allocation0]]
  $region62: #{mq_rnn_forward.1} parent=0
    _
  %s16 = ssub.s32 1, %s14
  %s17 = scalar_select 0, %s16, %s14
  // Predicated region
  $region2: #{mq_rnn_forward.1} parent=0 // pred_check
    _
  $region3: #{mq_rnn_forward.1} parent=0 // pred_check_branch
    %19 = sbr.rel (0) target = $region5
  $region4: #{mq_rnn_forward.1} parent=0 // pred_region
    _
  $region5: #{mq_rnn_forward.1} parent=0 // pred_fallthru
    _
  // Predicated region
  $region6: #{mq_rnn_forward.1} parent=0 // pred_check
    _
  $region7: #{mq_rnn_forward.1} parent=0 // pred_check_branch
    %21 = sbr.rel (0) target = $region9
  $region8: #{mq_rnn_forward.1} parent=0 // pred_region
    _
  $region9: #{mq_rnn_forward.1} parent=0 // pred_fallthru
    _
  // Predicated region
  $region10: #{mq_rnn_forward.1} parent=0 // pred_check
    _
  $region11: #{mq_rnn_forward.1} parent=0 // pred_check_branch
    %23 = sbr.rel (0) target = $region13
  $region12: #{mq_rnn_forward.1} parent=0 // pred_region
    _
  $region13: #{mq_rnn_forward.1} parent=0 // pred_fallthru
    _
  // Predicated region
  $region14: #{mq_rnn_forward.1} parent=0 // pred_check
    _
  $region15: #{mq_rnn_forward.1} parent=0 // pred_check_branch
    %25 = sbr.rel (0) target = $region17
  $region16: #{mq_rnn_forward.1} parent=0 // pred_region
    _
  $region17: #{mq_rnn_forward.1} parent=0 // pred_fallthru
    _
  // Predicated region
  $region18: #{mq_rnn_forward.1} parent=0 // pred_check
    _
  $region19: #{mq_rnn_forward.1} parent=0 // pred_check_branch
    %27 = sbr.rel (0) target = $region21
  $region20: #{mq_rnn_forward.1} parent=0 // pred_region
    _
  $region21: #{mq_rnn_forward.1} parent=0 // pred_fallthru
    _
  // Predicated region
  $region22: #{mq_rnn_forward.1} parent=0 // pred_check
    _
  $region23: #{mq_rnn_forward.1} parent=0 // pred_check_branch
    %29 = sbr.rel (0) target = $region25
  $region24: #{mq_rnn_forward.1} parent=0 // pred_region
    _
  $region25: #{mq_rnn_forward.1} parent=0 // pred_fallthru
    _
  // Predicated region
  $region26: #{mq_rnn_forward.1} parent=0 // pred_check
    _
  $region27: #{mq_rnn_forward.1} parent=0 // pred_check_branch
    %31 = sbr.rel (0) target = $region29
  $region28: #{mq_rnn_forward.1} parent=0 // pred_region
    _
  $region29: #{mq_rnn_forward.1} parent=0 // pred_fallthru
    _
  // Predicated region
  $region30: #{mq_rnn_forward.1} parent=0 // pred_check
    _
  $region31: #{mq_rnn_forward.1} parent=0 // pred_check_branch
    %33 = sbr.rel (0) target = $region33
  $region32: #{mq_rnn_forward.1} parent=0 // pred_region
    _
  $region33: #{mq_rnn_forward.1} parent=0 // pred_fallthru
    _
  // Predicated region
  $region34: #{mq_rnn_forward.1} parent=0 // pred_check
    _
  $region35: #{mq_rnn_forward.1} parent=0 // pred_check_branch
    %35 = sbr.rel (0) target = $region37
  $region36: #{mq_rnn_forward.1} parent=0 // pred_region
    _
  $region37: #{mq_rnn_forward.1} parent=0 // pred_fallthru
    _
  // Predicated region
  $region38: #{mq_rnn_forward.1} parent=0 // pred_check
    _
  $region39: #{mq_rnn_forward.1} parent=0 // pred_check_branch
    %37 = sbr.rel (0) target = $region41
  $region40: #{mq_rnn_forward.1} parent=0 // pred_region
    _
  $region41: #{mq_rnn_forward.1} parent=0 // pred_fallthru
    _
  // Predicated region
  $region42: #{mq_rnn_forward.1} parent=0 // pred_check
    _
  $region43: #{mq_rnn_forward.1} parent=0 // pred_check_branch
    %39 = sbr.rel (0) target = $region45
  $region44: #{mq_rnn_forward.1} parent=0 // pred_region
    _
  $region45: #{mq_rnn_forward.1} parent=0 // pred_fallthru
    _
  // Predicated region
  $region46: #{mq_rnn_forward.1} parent=0 // pred_check
    _
  $region47: #{mq_rnn_forward.1} parent=0 // pred_check_branch
    %41 = sbr.rel (0) target = $region49
  $region48: #{mq_rnn_forward.1} parent=0 // pred_region
    _
  $region49: #{mq_rnn_forward.1} parent=0 // pred_fallthru
    _
  // Predicated region
  $region50: #{mq_rnn_forward.1} parent=0 // pred_check
    _
  $region51: #{mq_rnn_forward.1} parent=0 // pred_check_branch
    %43 = sbr.rel (0) target = $region53
  $region52: #{mq_rnn_forward.1} parent=0 // pred_region
    _
  $region53: #{mq_rnn_forward.1} parent=0 // pred_fallthru
    _
  %v44 = vld [vmem:[%s0] sm:$0xff]
  %v45 = vld [vmem:[%s0 + $0x8] sm:$0xff]
  %v46 = vld [vmem:[%s0 + $0x10] sm:$0xff]
  %v47 = vld [vmem:[%s0 + $0x18] sm:$0xff]
  %v48 = vld [vmem:[%s0 + $0x20] sm:$0xff]
  %v49 = vld [vmem:[%s0 + $0x28] sm:$0xff]
  %v50 = vld [vmem:[%s0 + $0x30] sm:$0xff]
  %v51 = vld [vmem:[%s0 + $0x38] sm:$0xff]
  %v52 = vld [vmem:[%s2] sm:$0x3f]
  %vm53 = vcmask 48128
  %v55 = vsel %vm53, %v44, 0
  %v58 = vsel %vm53, %v45, 0
  %v61 = vsel %vm53, %v46, 0
  %v64 = vsel %vm53, %v47, 0
  %v67 = vsel %vm53, %v48, 0
  %v70 = vsel %vm53, %v49, 0
  %v73 = vsel %vm53, %v50, 0
  %v76 = vsel %vm53, %v51, 0
  %vm78 = vcmask 1045504
  %v80 = vsel %vm78, %v52, 0
  %82 = vmatprep.subr.mxu0 0.0
  %83 = vmatpush1.msra.mxu0 %v80
  %84 = vmatprep.subr.mxu0 0.0
  %85 = vmatpush1.msra.mxu0 0.0
  %86 = vmatprep.subr.mxu0 0.0
  %87 = vmatpush1.msra.mxu0 0.0
  %88 = vmatprep.subr.mxu0 0.0
  %89 = vmatpush1.msra.mxu0 0.0
  %90 = vmatprep.subr.mxu0 0.0
  %91 = vmatpush1.msra.mxu0 0.0
  %92 = vmatprep.subr.mxu0 0.0
  %93 = vmatpush1.msra.mxu0 0.0
  %94 = vmatprep.subr.mxu0 0.0
  %95 = vmatpush1.msra.mxu0 0.0
  %96 = vmatprep.subr.mxu0 0.0
  %97 = vmatpush1.msra.mxu0 0.0
  %98 = vmatprep.subr.mxu0 0.0
  %99 = vmatpush1.msra.mxu0 0.0
  %100 = vmatprep.subr.mxu0 0.0
  %101 = vmatpush1.msra.mxu0 0.0
  %102 = vmatprep.subr.mxu0 0.0
  %103 = vmatpush1.msra.mxu0 0.0
  %104 = vmatprep.subr.mxu0 0.0
  %105 = vmatpush1.msra.mxu0 0.0
  %106 = vmatprep.subr.mxu0 0.0
  %107 = vmatpush1.msra.mxu0 0.0
  %108 = vmatprep.subr.mxu0 0.0
  %109 = vmatpush1.msra.mxu0 0.0
  %110 = vmatprep.subr.mxu0 0.0
  %111 = vmatpush1.msra.mxu0 0.0
  %112 = vmatprep.subr.mxu0 0.0
  %113 = vmatpush1.msra.mxu0 0.0
  %114 = vmatprep.subr.mxu0 0.0
  %115 = vmatpush1.msra.mxu0 0.0
  %116 = vmatprep.subr.mxu0 0.0
  %117 = vmatpush1.msra.mxu0 0.0
  %118 = vmatprep.subr.mxu0 0.0
  %119 = vmatpush1.msra.mxu0 0.0
  %120 = vmatprep.subr.mxu0 0.0
  %121 = vmatpush1.msra.mxu0 0.0
  %122 = vmatprep.subr.mxu0 0.0
  %123 = vmatpush1.msra.mxu0 0.0
  %124 = vmatprep.subr.mxu0 0.0
  %125 = vmatpush1.msra.mxu0 0.0
  %126 = vmatprep.subr.mxu0 0.0
  %127 = vmatpush1.msra.mxu0 0.0
  %128 = vmatprep.subr.mxu0 0.0
  %129 = vmatpush1.msra.mxu0 0.0
  %130 = vmatprep.subr.mxu0 0.0
  %131 = vmatpush1.msra.mxu0 0.0
  %132 = vmatprep.subr.mxu0 0.0
  %133 = vmatpush1.msra.mxu0 0.0
  %134 = vmatprep.subr.mxu0 0.0
  %135 = vmatpush1.msra.mxu0 0.0
  %136 = vmatprep.subr.mxu0 0.0
  %137 = vmatpush1.msra.mxu0 0.0
  %138 = vmatprep.subr.mxu0 0.0
  %139 = vmatpush1.msra.mxu0 0.0
  %140 = vmatprep.subr.mxu0 0.0
  %141 = vmatpush1.msra.mxu0 0.0
  %142 = vmatprep.subr.mxu0 0.0
  %143 = vmatpush1.msra.mxu0 0.0
  %144 = vmatprep.subr.mxu0 0.0
  %145 = vmatpush1.msra.mxu0 0.0
  %146 = vmatprep.mubr.f32.mxu0 0.0
  %147 = vmatmul.mubr.f32.gmra.mrb[0].mxu0 %v55
  %v148 = vpop.f32.mrb[0].mxu0
  %v149 = vadd.f32 0.0, %v148
  %v150 = vpop.f32.mrb[0].mxu0
  %151 = vmatprep.mubr.f32.mxu0 0.0
  %152 = vmatmul.mubr.f32.gmra.mrb[0].mxu0 %v58
  %v153 = vpop.f32.mrb[0].mxu0
  %v154 = vadd.f32 0.0, %v153
  %v155 = vpop.f32.mrb[0].mxu0
  %156 = vmatprep.mubr.f32.mxu0 0.0
  %157 = vmatmul.mubr.f32.gmra.mrb[0].mxu0 %v61
  %v158 = vpop.f32.mrb[0].mxu0
  %v159 = vadd.f32 0.0, %v158
  %v160 = vpop.f32.mrb[0].mxu0
  %161 = vmatprep.mubr.f32.mxu0 0.0
  %162 = vmatmul.mubr.f32.gmra.mrb[0].mxu0 %v64
  %v163 = vpop.f32.mrb[0].mxu0
  %v164 = vadd.f32 0.0, %v163
  %v165 = vpop.f32.mrb[0].mxu0
  %166 = vmatprep.mubr.f32.mxu0 0.0
  %167 = vmatmul.mubr.f32.gmra.mrb[0].mxu0 %v67
  %v168 = vpop.f32.mrb[0].mxu0
  %v169 = vadd.f32 0.0, %v168
  %v170 = vpop.f32.mrb[0].mxu0
  %171 = vmatprep.mubr.f32.mxu0 0.0
  %172 = vmatmul.mubr.f32.gmra.mrb[0].mxu0 %v70
  %v173 = vpop.f32.mrb[0].mxu0
  %v174 = vadd.f32 0.0, %v173
  %v175 = vpop.f32.mrb[0].mxu0
  %176 = vmatprep.mubr.f32.mxu0 0.0
  %177 = vmatmul.mubr.f32.gmra.mrb[0].mxu0 %v73
  %v178 = vpop.f32.mrb[0].mxu0
  %v179 = vadd.f32 0.0, %v178
  %v180 = vpop.f32.mrb[0].mxu0
  %181 = vmatprep.mubr.f32.mxu0 0.0
  %182 = vmatmul.mubr.f32.gmra.mrb[0].mxu0 %v76
  %v183 = vpop.f32.mrb[0].mxu0
  %v184 = vadd.f32 0.0, %v183
  %v185 = vpop.f32.mrb[0].mxu0
  %186 = vdwg.mxu0
  %v187 = vtanh.pop %v149
  %v188 = vtanh.pop %v154
  %v189 = vtanh.pop %v159
  %v190 = vtanh.pop %v164
  %v191 = vtanh.pop %v169
  %v192 = vtanh.pop %v174
  %v193 = vtanh.pop %v179
  %v194 = vtanh.pop %v184
  %v195 = vld [vmem:[%s4] sm:$0xff]
  %v196 = vld [vmem:[%s3] sm:$0x3f]
  %v198 = vsel %vm78, %v196, 0
  %200 = vmatprep.subr.mxu0 0.0
  %201 = vmatpush1.msra.mxu0 %v198
  %202 = vmatprep.subr.mxu0 0.0
  %203 = vmatpush1.msra.mxu0 0.0
  %204 = vmatprep.subr.mxu0 0.0
  %205 = vmatpush1.msra.mxu0 0.0
  %206 = vmatprep.subr.mxu0 0.0
  %207 = vmatpush1.msra.mxu0 0.0
  %208 = vmatprep.subr.mxu0 0.0
  %209 = vmatpush1.msra.mxu0 0.0
  %210 = vmatprep.subr.mxu0 0.0
  %211 = vmatpush1.msra.mxu0 0.0
  %212 = vmatprep.subr.mxu0 0.0
  %213 = vmatpush1.msra.mxu0 0.0
  %214 = vmatprep.subr.mxu0 0.0
  %215 = vmatpush1.msra.mxu0 0.0
  %216 = vmatprep.subr.mxu0 0.0
  %217 = vmatpush1.msra.mxu0 0.0
  %218 = vmatprep.subr.mxu0 0.0
  %219 = vmatpush1.msra.mxu0 0.0
  %220 = vmatprep.subr.mxu0 0.0
  %221 = vmatpush1.msra.mxu0 0.0
  %222 = vmatprep.subr.mxu0 0.0
  %223 = vmatpush1.msra.mxu0 0.0
  %224 = vmatprep.subr.mxu0 0.0
  %225 = vmatpush1.msra.mxu0 0.0
  %226 = vmatprep.subr.mxu0 0.0
  %227 = vmatpush1.msra.mxu0 0.0
  %228 = vmatprep.subr.mxu0 0.0
  %229 = vmatpush1.msra.mxu0 0.0
  %230 = vmatprep.subr.mxu0 0.0
  %231 = vmatpush1.msra.mxu0 0.0
  %232 = vmatprep.subr.mxu0 0.0
  %233 = vmatpush1.msra.mxu0 0.0
  %234 = vmatprep.subr.mxu0 0.0
  %235 = vmatpush1.msra.mxu0 0.0
  %236 = vmatprep.subr.mxu0 0.0
  %237 = vmatpush1.msra.mxu0 0.0
  %238 = vmatprep.subr.mxu0 0.0
  %239 = vmatpush1.msra.mxu0 0.0
  %240 = vmatprep.subr.mxu0 0.0
  %241 = vmatpush1.msra.mxu0 0.0
  %242 = vmatprep.subr.mxu0 0.0
  %243 = vmatpush1.msra.mxu0 0.0
  %244 = vmatprep.subr.mxu0 0.0
  %245 = vmatpush1.msra.mxu0 0.0
  %246 = vmatprep.subr.mxu0 0.0
  %247 = vmatpush1.msra.mxu0 0.0
  %248 = vmatprep.subr.mxu0 0.0
  %249 = vmatpush1.msra.mxu0 0.0
  %250 = vmatprep.subr.mxu0 0.0
  %251 = vmatpush1.msra.mxu0 0.0
  %252 = vmatprep.subr.mxu0 0.0
  %253 = vmatpush1.msra.mxu0 0.0
  %254 = vmatprep.subr.mxu0 0.0
  %255 = vmatpush1.msra.mxu0 0.0
  %256 = vmatprep.subr.mxu0 0.0
  %257 = vmatpush1.msra.mxu0 0.0
  %258 = vmatprep.subr.mxu0 0.0
  %259 = vmatpush1.msra.mxu0 0.0
  %260 = vmatprep.subr.mxu0 0.0
  %261 = vmatpush1.msra.mxu0 0.0
  %262 = vmatprep.subr.mxu0 0.0
  %263 = vmatpush1.msra.mxu0 0.0
  %264 = vmatprep.mubr.f32.mxu0 0.0
  %265 = vmatmul.mubr.f32.gmra.mrb[0].mxu0 %v55
  %v266 = vpop.f32.mrb[0].mxu0
  %v267 = vadd.f32 0.0, %v266
  %v268 = vpop.f32.mrb[0].mxu0
  %269 = vmatprep.mubr.f32.mxu0 0.0
  %270 = vmatmul.mubr.f32.gmra.mrb[0].mxu0 %v58
  %v271 = vpop.f32.mrb[0].mxu0
  %v272 = vadd.f32 0.0, %v271
  %v273 = vpop.f32.mrb[0].mxu0
  %274 = vmatprep.mubr.f32.mxu0 0.0
  %275 = vmatmul.mubr.f32.gmra.mrb[0].mxu0 %v61
  %v276 = vpop.f32.mrb[0].mxu0
  %v277 = vadd.f32 0.0, %v276
  %v278 = vpop.f32.mrb[0].mxu0
  %279 = vmatprep.mubr.f32.mxu0 0.0
  %280 = vmatmul.mubr.f32.gmra.mrb[0].mxu0 %v64
  %v281 = vpop.f32.mrb[0].mxu0
  %v282 = vadd.f32 0.0, %v281
  %v283 = vpop.f32.mrb[0].mxu0
  %284 = vmatprep.mubr.f32.mxu0 0.0
  %285 = vmatmul.mubr.f32.gmra.mrb[0].mxu0 %v67
  %v286 = vpop.f32.mrb[0].mxu0
  %v287 = vadd.f32 0.0, %v286
  %v288 = vpop.f32.mrb[0].mxu0
  %289 = vmatprep.mubr.f32.mxu0 0.0
  %290 = vmatmul.mubr.f32.gmra.mrb[0].mxu0 %v70
  %v291 = vpop.f32.mrb[0].mxu0
  %v292 = vadd.f32 0.0, %v291
  %v293 = vpop.f32.mrb[0].mxu0
  %294 = vmatprep.mubr.f32.mxu0 0.0
  %295 = vmatmul.mubr.f32.gmra.mrb[0].mxu0 %v73
  %v296 = vpop.f32.mrb[0].mxu0
  %v297 = vadd.f32 0.0, %v296
  %v298 = vpop.f32.mrb[0].mxu0
  %299 = vmatprep.mubr.f32.mxu0 0.0
  %300 = vmatmul.mubr.f32.gmra.mrb[0].mxu0 %v76
  %v301 = vpop.f32.mrb[0].mxu0
  %v302 = vadd.f32 0.0, %v301
  %v303 = vpop.f32.mrb[0].mxu0
  %304 = vdwg.mxu0
  %vm305 = vcmask 64512
  %v307 = vsel %vm305, %v187, 0
  %v310 = vsel %vm305, %v188, 0
  %v313 = vsel %vm305, %v189, 0
  %v316 = vsel %vm305, %v190, 0
  %v319 = vsel %vm305, %v191, 0
  %v322 = vsel %vm305, %v192, 0
  %v325 = vsel %vm305, %v193, 0
  %v328 = vsel %vm305, %v194, 0
  %330 = vmatprep.subr.mxu0 0.0
  %331 = vmatpush1.msra.mxu0 %v195
  %332 = vmatprep.subr.mxu0 0.0
  %333 = vmatpush1.msra.mxu0 0.0
  %334 = vmatprep.subr.mxu0 0.0
  %335 = vmatpush1.msra.mxu0 0.0
  %336 = vmatprep.subr.mxu0 0.0
  %337 = vmatpush1.msra.mxu0 0.0
  %338 = vmatprep.subr.mxu0 0.0
  %339 = vmatpush1.msra.mxu0 0.0
  %340 = vmatprep.subr.mxu0 0.0
  %341 = vmatpush1.msra.mxu0 0.0
  %342 = vmatprep.subr.mxu0 0.0
  %343 = vmatpush1.msra.mxu0 0.0
  %344 = vmatprep.subr.mxu0 0.0
  %345 = vmatpush1.msra.mxu0 0.0
  %346 = vmatprep.subr.mxu0 0.0
  %347 = vmatpush1.msra.mxu0 0.0
  %348 = vmatprep.subr.mxu0 0.0
  %349 = vmatpush1.msra.mxu0 0.0
  %350 = vmatprep.subr.mxu0 0.0
  %351 = vmatpush1.msra.mxu0 0.0
  %352 = vmatprep.subr.mxu0 0.0
  %353 = vmatpush1.msra.mxu0 0.0
  %354 = vmatprep.subr.mxu0 0.0
  %355 = vmatpush1.msra.mxu0 0.0
  %356 = vmatprep.subr.mxu0 0.0
  %357 = vmatpush1.msra.mxu0 0.0
  %358 = vmatprep.subr.mxu0 0.0
  %359 = vmatpush1.msra.mxu0 0.0
  %360 = vmatprep.subr.mxu0 0.0
  %361 = vmatpush1.msra.mxu0 0.0
  %362 = vmatprep.subr.mxu0 0.0
  %363 = vmatpush1.msra.mxu0 0.0
  %364 = vmatprep.subr.mxu0 0.0
  %365 = vmatpush1.msra.mxu0 0.0
  %366 = vmatprep.subr.mxu0 0.0
  %367 = vmatpush1.msra.mxu0 0.0
  %368 = vmatprep.subr.mxu0 0.0
  %369 = vmatpush1.msra.mxu0 0.0
  %370 = vmatprep.subr.mxu0 0.0
  %371 = vmatpush1.msra.mxu0 0.0
  %372 = vmatprep.subr.mxu0 0.0
  %373 = vmatpush1.msra.mxu0 0.0
  %374 = vmatprep.subr.mxu0 0.0
  %375 = vmatpush1.msra.mxu0 0.0
  %376 = vmatprep.subr.mxu0 0.0
  %377 = vmatpush1.msra.mxu0 0.0
  %378 = vmatprep.subr.mxu0 0.0
  %379 = vmatpush1.msra.mxu0 0.0
  %380 = vmatprep.subr.mxu0 0.0
  %381 = vmatpush1.msra.mxu0 0.0
  %382 = vmatprep.subr.mxu0 0.0
  %383 = vmatpush1.msra.mxu0 0.0
  %384 = vmatprep.subr.mxu0 0.0
  %385 = vmatpush1.msra.mxu0 0.0
  %386 = vmatprep.subr.mxu0 0.0
  %387 = vmatpush1.msra.mxu0 0.0
  %388 = vmatprep.subr.mxu0 0.0
  %389 = vmatpush1.msra.mxu0 0.0
  %390 = vmatprep.subr.mxu0 0.0
  %391 = vmatpush1.msra.mxu0 0.0
  %392 = vmatprep.subr.mxu0 0.0
  %393 = vmatpush1.msra.mxu0 0.0
  %394 = vmatprep.mubr.f32.mxu0 0.0
  %395 = vmatmul.mubr.f32.gmra.mrb[0].mxu0 %v307
  %v396 = vpop.f32.mrb[0].mxu0
  %v397 = vadd.f32 %v267, %v396
  %v398 = vpop.f32.mrb[0].mxu0
  %399 = vmatprep.mubr.f32.mxu0 0.0
  %400 = vmatmul.mubr.f32.gmra.mrb[0].mxu0 %v310
  %v401 = vpop.f32.mrb[0].mxu0
  %v402 = vadd.f32 %v272, %v401
  %v403 = vpop.f32.mrb[0].mxu0
  %404 = vmatprep.mubr.f32.mxu0 0.0
  %405 = vmatmul.mubr.f32.gmra.mrb[0].mxu0 %v313
  %v406 = vpop.f32.mrb[0].mxu0
  %v407 = vadd.f32 %v277, %v406
  %v408 = vpop.f32.mrb[0].mxu0
  %409 = vmatprep.mubr.f32.mxu0 0.0
  %410 = vmatmul.mubr.f32.gmra.mrb[0].mxu0 %v316
  %v411 = vpop.f32.mrb[0].mxu0
  %v412 = vadd.f32 %v282, %v411
  %v413 = vpop.f32.mrb[0].mxu0
  %414 = vmatprep.mubr.f32.mxu0 0.0
  %415 = vmatmul.mubr.f32.gmra.mrb[0].mxu0 %v319
  %v416 = vpop.f32.mrb[0].mxu0
  %v417 = vadd.f32 %v287, %v416
  %v418 = vpop.f32.mrb[0].mxu0
  %419 = vmatprep.mubr.f32.mxu0 0.0
  %420 = vmatmul.mubr.f32.gmra.mrb[0].mxu0 %v322
  %v421 = vpop.f32.mrb[0].mxu0
  %v422 = vadd.f32 %v292, %v421
  %v423 = vpop.f32.mrb[0].mxu0
  %424 = vmatprep.mubr.f32.mxu0 0.0
  %425 = vmatmul.mubr.f32.gmra.mrb[0].mxu0 %v325
  %v426 = vpop.f32.mrb[0].mxu0
  %v427 = vadd.f32 %v297, %v426
  %v428 = vpop.f32.mrb[0].mxu0
  %429 = vmatprep.mubr.f32.mxu0 0.0
  %430 = vmatmul.mubr.f32.gmra.mrb[0].mxu0 %v328
  %v431 = vpop.f32.mrb[0].mxu0
  %v432 = vadd.f32 %v302, %v431
  %v433 = vpop.f32.mrb[0].mxu0
  %434 = vdwg.mxu0
  %435 = vst [vmem:[#allocation2] sm:$0xff] %v397
  %436 = vst [vmem:[#allocation2 + $0x8] sm:$0xff] %v402
  %437 = vst [vmem:[#allocation2 + $0x10] sm:$0xff] %v407
  %438 = vst [vmem:[#allocation2 + $0x18] sm:$0xff] %v412
  %439 = vst [vmem:[#allocation2 + $0x20] sm:$0xff] %v417
  %440 = vst [vmem:[#allocation2 + $0x28] sm:$0xff] %v422
  %441 = vst [vmem:[#allocation2 + $0x30] sm:$0xff] %v427
  %442 = vst [vmem:[#allocation2 + $0x38] sm:$0xff] %v432
  %v443 = vld [vmem:[%s5] sm:$0xff]
  %v444 = vld [vmem:[%s5 + $0x8] sm:$0xff]
  %v445 = vld [vmem:[%s5 + $0x10] sm:$0xff]
  %v446 = vld [vmem:[%s5 + $0x18] sm:$0xff]
  %v447 = vld [vmem:[#allocation2] sm:$0xff]
  %vm448 = vcmask 261120
  %v450 = vsel %vm448, 0.0, 0
  %452 = vmatprep.subr.mxu0 0.0
  %453 = vmatpush1.msra.mxu0 %v443
  %454 = vmatprep.subr.mxu0 0.0
  %455 = vmatpush1.msra.mxu0 %v444
  %456 = vmatprep.subr.mxu0 0.0
  %457 = vmatpush1.msra.mxu0 %v445
  %458 = vmatprep.subr.mxu0 0.0
  %459 = vmatpush1.msra.mxu0 %v446
  %460 = vmatprep.subr.mxu0 0.0
  %461 = vmatpush1.msra.mxu0 0.0
  %462 = vmatprep.subr.mxu0 0.0
  %463 = vmatpush1.msra.mxu0 0.0
  %464 = vmatprep.subr.mxu0 0.0
  %465 = vmatpush1.msra.mxu0 0.0
  %466 = vmatprep.subr.mxu0 0.0
  %467 = vmatpush1.msra.mxu0 0.0
  %468 = vmatprep.subr.mxu0 0.0
  %469 = vmatpush1.msra.mxu0 0.0
  %470 = vmatprep.subr.mxu0 0.0
  %471 = vmatpush1.msra.mxu0 0.0
  %472 = vmatprep.subr.mxu0 0.0
  %473 = vmatpush1.msra.mxu0 0.0
  %474 = vmatprep.subr.mxu0 0.0
  %475 = vmatpush1.msra.mxu0 0.0
  %476 = vmatprep.subr.mxu0 0.0
  %477 = vmatpush1.msra.mxu0 0.0
  %478 = vmatprep.subr.mxu0 0.0
  %479 = vmatpush1.msra.mxu0 0.0
  %480 = vmatprep.subr.mxu0 0.0
  %481 = vmatpush1.msra.mxu0 0.0
  %482 = vmatprep.subr.mxu0 0.0
  %483 = vmatpush1.msra.mxu0 0.0
  %484 = vmatprep.subr.mxu0 0.0
  %485 = vmatpush1.msra.mxu0 0.0
  %486 = vmatprep.subr.mxu0 0.0
  %487 = vmatpush1.msra.mxu0 0.0
  %488 = vmatprep.subr.mxu0 0.0
  %489 = vmatpush1.msra.mxu0 0.0
  %490 = vmatprep.subr.mxu0 0.0
  %491 = vmatpush1.msra.mxu0 0.0
  %492 = vmatprep.subr.mxu0 0.0
  %493 = vmatpush1.msra.mxu0 0.0
  %494 = vmatprep.subr.mxu0 0.0
  %495 = vmatpush1.msra.mxu0 0.0
  %496 = vmatprep.subr.mxu0 0.0
  %497 = vmatpush1.msra.mxu0 0.0
  %498 = vmatprep.subr.mxu0 0.0
  %499 = vmatpush1.msra.mxu0 0.0
  %500 = vmatprep.subr.mxu0 0.0
  %501 = vmatpush1.msra.mxu0 0.0
  %502 = vmatprep.subr.mxu0 0.0
  %503 = vmatpush1.msra.mxu0 0.0
  %504 = vmatprep.subr.mxu0 0.0
  %505 = vmatpush1.msra.mxu0 0.0
  %506 = vmatprep.subr.mxu0 0.0
  %507 = vmatpush1.msra.mxu0 0.0
  %508 = vmatprep.subr.mxu0 0.0
  %509 = vmatpush1.msra.mxu0 0.0
  %510 = vmatprep.subr.mxu0 0.0
  %511 = vmatpush1.msra.mxu0 0.0
  %512 = vmatprep.subr.mxu0 0.0
  %513 = vmatpush1.msra.mxu0 0.0
  %514 = vmatprep.subr.mxu0 0.0
  %515 = vmatpush1.msra.mxu0 0.0
  %516 = vmatprep.mubr.f32.mxu0 0.0
  %517 = vmatmul.mubr.f32.gmra.mrb[0].mxu0 %v450
  %v518 = vpop.f32.mrb[0].mxu0
  %v519 = vadd.f32 0.0, %v518
  %v520 = vpop.f32.mrb[0].mxu0
  %521 = vdwg.mxu0
  %v522 = vadd.f32 %v447, %v519
  %v523 = vxor.u32 %v522, 2147483648
  %v524 = vmul.f32 %v523, 1.442695
  %v525 = vpow.pop %v524
  %v526 = vadd.f32 %v525, 1.0
  %v527 = vrcp.pop %v526
  %v528 = vmul.f32 1.0, %v527
  %v529 = vtanh.pop %v522
  %v530 = vmul.f32 %v528, 0.0
  %532 = vrot.lane.b32.xlu0 %v529, 64
  %v533 = vpop.permute.xlu0 %532
  %v535 = vmul.f32 %v528, %v533
  %537 = vrot.lane.b32.xlu0 %v535, 32
  %v538 = vpop.permute.xlu0 %537
  %v540 = vadd.f32 %v530, %v538
  %v541 = vtanh.pop %v540
  %543 = vrot.lane.b32.xlu0 %v541, 64
  %v544 = vpop.permute.xlu0 %543
  %v546 = vmul.f32 %v528, %v544
  %s547 = scalar_lea.vmem [#allocation2], 8
  %v548 = vld [vmem:[%s547] sm:$0xff]
  %550 = vrot.lane.b32.xlu0 %v546, 32
  %v551 = vpop.permute.xlu0 %550
  %v552 = vsel %vm448, %v551, 0
  %554 = vmatprep.subr.mxu0 0.0
  %555 = vmatpush1.msra.mxu0 %v443
  %556 = vmatprep.subr.mxu0 0.0
  %557 = vmatpush1.msra.mxu0 %v444
  %558 = vmatprep.subr.mxu0 0.0
  %559 = vmatpush1.msra.mxu0 %v445
  %560 = vmatprep.subr.mxu0 0.0
  %561 = vmatpush1.msra.mxu0 %v446
  %562 = vmatprep.subr.mxu0 0.0
  %563 = vmatpush1.msra.mxu0 0.0
  %564 = vmatprep.subr.mxu0 0.0
  %565 = vmatpush1.msra.mxu0 0.0
  %566 = vmatprep.subr.mxu0 0.0
  %567 = vmatpush1.msra.mxu0 0.0
  %568 = vmatprep.subr.mxu0 0.0
  %569 = vmatpush1.msra.mxu0 0.0
  %570 = vmatprep.subr.mxu0 0.0
  %571 = vmatpush1.msra.mxu0 0.0
  %572 = vmatprep.subr.mxu0 0.0
  %573 = vmatpush1.msra.mxu0 0.0
  %574 = vmatprep.subr.mxu0 0.0
  %575 = vmatpush1.msra.mxu0 0.0
  %576 = vmatprep.subr.mxu0 0.0
  %577 = vmatpush1.msra.mxu0 0.0
  %578 = vmatprep.subr.mxu0 0.0
  %579 = vmatpush1.msra.mxu0 0.0
  %580 = vmatprep.subr.mxu0 0.0
  %581 = vmatpush1.msra.mxu0 0.0
  %582 = vmatprep.subr.mxu0 0.0
  %583 = vmatpush1.msra.mxu0 0.0
  %584 = vmatprep.subr.mxu0 0.0
  %585 = vmatpush1.msra.mxu0 0.0
  %586 = vmatprep.subr.mxu0 0.0
  %587 = vmatpush1.msra.mxu0 0.0
  %588 = vmatprep.subr.mxu0 0.0
  %589 = vmatpush1.msra.mxu0 0.0
  %590 = vmatprep.subr.mxu0 0.0
  %591 = vmatpush1.msra.mxu0 0.0
  %592 = vmatprep.subr.mxu0 0.0
  %593 = vmatpush1.msra.mxu0 0.0
  %594 = vmatprep.subr.mxu0 0.0
  %595 = vmatpush1.msra.mxu0 0.0
  %596 = vmatprep.subr.mxu0 0.0
  %597 = vmatpush1.msra.mxu0 0.0
  %598 = vmatprep.subr.mxu0 0.0
  %599 = vmatpush1.msra.mxu0 0.0
  %600 = vmatprep.subr.mxu0 0.0
  %601 = vmatpush1.msra.mxu0 0.0
  %602 = vmatprep.subr.mxu0 0.0
  %603 = vmatpush1.msra.mxu0 0.0
  %604 = vmatprep.subr.mxu0 0.0
  %605 = vmatpush1.msra.mxu0 0.0
  %606 = vmatprep.subr.mxu0 0.0
  %607 = vmatpush1.msra.mxu0 0.0
  %608 = vmatprep.subr.mxu0 0.0
  %609 = vmatpush1.msra.mxu0 0.0
  %610 = vmatprep.subr.mxu0 0.0
  %611 = vmatpush1.msra.mxu0 0.0
  %612 = vmatprep.subr.mxu0 0.0
  %613 = vmatpush1.msra.mxu0 0.0
  %614 = vmatprep.subr.mxu0 0.0
  %615 = vmatpush1.msra.mxu0 0.0
  %616 = vmatprep.subr.mxu0 0.0
  %617 = vmatpush1.msra.mxu0 0.0
  %618 = vmatprep.mubr.f32.mxu0 0.0
  %619 = vmatmul.mubr.f32.gmra.mrb[0].mxu0 %v552
  %v620 = vpop.f32.mrb[0].mxu0
  %v621 = vadd.f32 0.0, %v620
  %v622 = vpop.f32.mrb[0].mxu0
  %623 = vdwg.mxu0
  %v624 = vadd.f32 %v548, %v621
  %v625 = vxor.u32 %v624, 2147483648
  %v626 = vmul.f32 %v625, 1.442695
  %v627 = vpow.pop %v626
  %v628 = vadd.f32 %v627, 1.0
  %v629 = vrcp.pop %v628
  %v630 = vmul.f32 1.0, %v629
  %v631 = vtanh.pop %v624
  %v632 = vmul.f32 %v630, %v540
  %634 = vrot.lane.b32.xlu0 %v631, 64
  %v635 = vpop.permute.xlu0 %634
  %v637 = vmul.f32 %v630, %v635
  %639 = vrot.lane.b32.xlu0 %v637, 32
  %v640 = vpop.permute.xlu0 %639
  %v642 = vadd.f32 %v632, %v640
  %v643 = vtanh.pop %v642
  %645 = vrot.lane.b32.xlu0 %v643, 64
  %v646 = vpop.permute.xlu0 %645
  %v648 = vmul.f32 %v630, %v646
  %s649 = scalar_lea.vmem [#allocation2], 16
  %v650 = vld [vmem:[%s649] sm:$0xff]
  %652 = vrot.lane.b32.xlu0 %v648, 32
  %v653 = vpop.permute.xlu0 %652
  %v654 = vsel %vm448, %v653, 0
  %656 = vmatprep.subr.mxu0 0.0
  %657 = vmatpush1.msra.mxu0 %v443
  %658 = vmatprep.subr.mxu0 0.0
  %659 = vmatpush1.msra.mxu0 %v444
  %660 = vmatprep.subr.mxu0 0.0
  %661 = vmatpush1.msra.mxu0 %v445
  %662 = vmatprep.subr.mxu0 0.0
  %663 = vmatpush1.msra.mxu0 %v446
  %664 = vmatprep.subr.mxu0 0.0
  %665 = vmatpush1.msra.mxu0 0.0
  %666 = vmatprep.subr.mxu0 0.0
  %667 = vmatpush1.msra.mxu0 0.0
  %668 = vmatprep.subr.mxu0 0.0
  %669 = vmatpush1.msra.mxu0 0.0
  %670 = vmatprep.subr.mxu0 0.0
  %671 = vmatpush1.msra.mxu0 0.0
  %672 = vmatprep.subr.mxu0 0.0
  %673 = vmatpush1.msra.mxu0 0.0
  %674 = vmatprep.subr.mxu0 0.0
  %675 = vmatpush1.msra.mxu0 0.0
  %676 = vmatprep.subr.mxu0 0.0
  %677 = vmatpush1.msra.mxu0 0.0
  %678 = vmatprep.subr.mxu0 0.0
  %679 = vmatpush1.msra.mxu0 0.0
  %680 = vmatprep.subr.mxu0 0.0
  %681 = vmatpush1.msra.mxu0 0.0
  %682 = vmatprep.subr.mxu0 0.0
  %683 = vmatpush1.msra.mxu0 0.0
  %684 = vmatprep.subr.mxu0 0.0
  %685 = vmatpush1.msra.mxu0 0.0
  %686 = vmatprep.subr.mxu0 0.0
  %687 = vmatpush1.msra.mxu0 0.0
  %688 = vmatprep.subr.mxu0 0.0
  %689 = vmatpush1.msra.mxu0 0.0
  %690 = vmatprep.subr.mxu0 0.0
  %691 = vmatpush1.msra.mxu0 0.0
  %692 = vmatprep.subr.mxu0 0.0
  %693 = vmatpush1.msra.mxu0 0.0
  %694 = vmatprep.subr.mxu0 0.0
  %695 = vmatpush1.msra.mxu0 0.0
  %696 = vmatprep.subr.mxu0 0.0
  %697 = vmatpush1.msra.mxu0 0.0
  %698 = vmatprep.subr.mxu0 0.0
  %699 = vmatpush1.msra.mxu0 0.0
  %700 = vmatprep.subr.mxu0 0.0
  %701 = vmatpush1.msra.mxu0 0.0
  %702 = vmatprep.subr.mxu0 0.0
  %703 = vmatpush1.msra.mxu0 0.0
  %704 = vmatprep.subr.mxu0 0.0
  %705 = vmatpush1.msra.mxu0 0.0
  %706 = vmatprep.subr.mxu0 0.0
  %707 = vmatpush1.msra.mxu0 0.0
  %708 = vmatprep.subr.mxu0 0.0
  %709 = vmatpush1.msra.mxu0 0.0
  %710 = vmatprep.subr.mxu0 0.0
  %711 = vmatpush1.msra.mxu0 0.0
  %712 = vmatprep.subr.mxu0 0.0
  %713 = vmatpush1.msra.mxu0 0.0
  %714 = vmatprep.subr.mxu0 0.0
  %715 = vmatpush1.msra.mxu0 0.0
  %716 = vmatprep.subr.mxu0 0.0
  %717 = vmatpush1.msra.mxu0 0.0
  %718 = vmatprep.subr.mxu0 0.0
  %719 = vmatpush1.msra.mxu0 0.0
  %720 = vmatprep.mubr.f32.mxu0 0.0
  %721 = vmatmul.mubr.f32.gmra.mrb[0].mxu0 %v654
  %v722 = vpop.f32.mrb[0].mxu0
  %v723 = vadd.f32 0.0, %v722
  %v724 = vpop.f32.mrb[0].mxu0
  %725 = vdwg.mxu0
  %v726 = vadd.f32 %v650, %v723
  %v727 = vxor.u32 %v726, 2147483648
  %v728 = vmul.f32 %v727, 1.442695
  %v729 = vpow.pop %v728
  %v730 = vadd.f32 %v729, 1.0
  %v731 = vrcp.pop %v730
  %v732 = vmul.f32 1.0, %v731
  %v733 = vtanh.pop %v726
  %v734 = vmul.f32 %v732, %v642
  %736 = vrot.lane.b32.xlu0 %v733, 64
  %v737 = vpop.permute.xlu0 %736
  %v739 = vmul.f32 %v732, %v737
  %741 = vrot.lane.b32.xlu0 %v739, 32
  %v742 = vpop.permute.xlu0 %741
  %v744 = vadd.f32 %v734, %v742
  %v745 = vtanh.pop %v744
  %747 = vrot.lane.b32.xlu0 %v745, 64
  %v748 = vpop.permute.xlu0 %747
  %v750 = vmul.f32 %v732, %v748
  %s751 = scalar_lea.vmem [#allocation2], 24
  %v752 = vld [vmem:[%s751] sm:$0xff]
  %754 = vrot.lane.b32.xlu0 %v750, 32
  %v755 = vpop.permute.xlu0 %754
  %v756 = vsel %vm448, %v755, 0
  %758 = vmatprep.subr.mxu0 0.0
  %759 = vmatpush1.msra.mxu0 %v443
  %760 = vmatprep.subr.mxu0 0.0
  %761 = vmatpush1.msra.mxu0 %v444
  %762 = vmatprep.subr.mxu0 0.0
  %763 = vmatpush1.msra.mxu0 %v445
  %764 = vmatprep.subr.mxu0 0.0
  %765 = vmatpush1.msra.mxu0 %v446
  %766 = vmatprep.subr.mxu0 0.0
  %767 = vmatpush1.msra.mxu0 0.0
  %768 = vmatprep.subr.mxu0 0.0
  %769 = vmatpush1.msra.mxu0 0.0
  %770 = vmatprep.subr.mxu0 0.0
  %771 = vmatpush1.msra.mxu0 0.0
  %772 = vmatprep.subr.mxu0 0.0
  %773 = vmatpush1.msra.mxu0 0.0
  %774 = vmatprep.subr.mxu0 0.0
  %775 = vmatpush1.msra.mxu0 0.0
  %776 = vmatprep.subr.mxu0 0.0
  %777 = vmatpush1.msra.mxu0 0.0
  %778 = vmatprep.subr.mxu0 0.0
  %779 = vmatpush1.msra.mxu0 0.0
  %780 = vmatprep.subr.mxu0 0.0
  %781 = vmatpush1.msra.mxu0 0.0
  %782 = vmatprep.subr.mxu0 0.0
  %783 = vmatpush1.msra.mxu0 0.0
  %784 = vmatprep.subr.mxu0 0.0
  %785 = vmatpush1.msra.mxu0 0.0
  %786 = vmatprep.subr.mxu0 0.0
  %787 = vmatpush1.msra.mxu0 0.0
  %788 = vmatprep.subr.mxu0 0.0
  %789 = vmatpush1.msra.mxu0 0.0
  %790 = vmatprep.subr.mxu0 0.0
  %791 = vmatpush1.msra.mxu0 0.0
  %792 = vmatprep.subr.mxu0 0.0
  %793 = vmatpush1.msra.mxu0 0.0
  %794 = vmatprep.subr.mxu0 0.0
  %795 = vmatpush1.msra.mxu0 0.0
  %796 = vmatprep.subr.mxu0 0.0
  %797 = vmatpush1.msra.mxu0 0.0
  %798 = vmatprep.subr.mxu0 0.0
  %799 = vmatpush1.msra.mxu0 0.0
  %800 = vmatprep.subr.mxu0 0.0
  %801 = vmatpush1.msra.mxu0 0.0
  %802 = vmatprep.subr.mxu0 0.0
  %803 = vmatpush1.msra.mxu0 0.0
  %804 = vmatprep.subr.mxu0 0.0
  %805 = vmatpush1.msra.mxu0 0.0
  %806 = vmatprep.subr.mxu0 0.0
  %807 = vmatpush1.msra.mxu0 0.0
  %808 = vmatprep.subr.mxu0 0.0
  %809 = vmatpush1.msra.mxu0 0.0
  %810 = vmatprep.subr.mxu0 0.0
  %811 = vmatpush1.msra.mxu0 0.0
  %812 = vmatprep.subr.mxu0 0.0
  %813 = vmatpush1.msra.mxu0 0.0
  %814 = vmatprep.subr.mxu0 0.0
  %815 = vmatpush1.msra.mxu0 0.0
  %816 = vmatprep.subr.mxu0 0.0
  %817 = vmatpush1.msra.mxu0 0.0
  %818 = vmatprep.subr.mxu0 0.0
  %819 = vmatpush1.msra.mxu0 0.0
  %820 = vmatprep.subr.mxu0 0.0
  %821 = vmatpush1.msra.mxu0 0.0
  %822 = vmatprep.mubr.f32.mxu0 0.0
  %823 = vmatmul.mubr.f32.gmra.mrb[0].mxu0 %v756
  %v824 = vpop.f32.mrb[0].mxu0
  %v825 = vadd.f32 0.0, %v824
  %v826 = vpop.f32.mrb[0].mxu0
  %827 = vdwg.mxu0
  %v828 = vadd.f32 %v752, %v825
  %v829 = vxor.u32 %v828, 2147483648
  %v830 = vmul.f32 %v829, 1.442695
  %v831 = vpow.pop %v830
  %v832 = vadd.f32 %v831, 1.0
  %v833 = vrcp.pop %v832
  %v834 = vmul.f32 1.0, %v833
  %v835 = vtanh.pop %v828
  %v836 = vmul.f32 %v834, %v744
  %838 = vrot.lane.b32.xlu0 %v835, 64
  %v839 = vpop.permute.xlu0 %838
  %v841 = vmul.f32 %v834, %v839
  %843 = vrot.lane.b32.xlu0 %v841, 32
  %v844 = vpop.permute.xlu0 %843
  %v846 = vadd.f32 %v836, %v844
  %v847 = vtanh.pop %v846
  %849 = vrot.lane.b32.xlu0 %v847, 64
  %v850 = vpop.permute.xlu0 %849
  %v852 = vmul.f32 %v834, %v850
  %s853 = scalar_lea.vmem [#allocation2], 32
  %v854 = vld [vmem:[%s853] sm:$0xff]
  %856 = vrot.lane.b32.xlu0 %v852, 32
  %v857 = vpop.permute.xlu0 %856
  %v858 = vsel %vm448, %v857, 0
  %860 = vmatprep.subr.mxu0 0.0
  %861 = vmatpush1.msra.mxu0 %v443
  %862 = vmatprep.subr.mxu0 0.0
  %863 = vmatpush1.msra.mxu0 %v444
  %864 = vmatprep.subr.mxu0 0.0
  %865 = vmatpush1.msra.mxu0 %v445
  %866 = vmatprep.subr.mxu0 0.0
  %867 = vmatpush1.msra.mxu0 %v446
  %868 = vmatprep.subr.mxu0 0.0
  %869 = vmatpush1.msra.mxu0 0.0
  %870 = vmatprep.subr.mxu0 0.0
  %871 = vmatpush1.msra.mxu0 0.0
  %872 = vmatprep.subr.mxu0 0.0
  %873 = vmatpush1.msra.mxu0 0.0
  %874 = vmatprep.subr.mxu0 0.0
  %875 = vmatpush1.msra.mxu0 0.0
  %876 = vmatprep.subr.mxu0 0.0
  %877 = vmatpush1.msra.mxu0 0.0
  %878 = vmatprep.subr.mxu0 0.0
  %879 = vmatpush1.msra.mxu0 0.0
  %880 = vmatprep.subr.mxu0 0.0
  %881 = vmatpush1.msra.mxu0 0.0
  %882 = vmatprep.subr.mxu0 0.0
  %883 = vmatpush1.msra.mxu0 0.0
  %884 = vmatprep.subr.mxu0 0.0
  %885 = vmatpush1.msra.mxu0 0.0
  %886 = vmatprep.subr.mxu0 0.0
  %887 = vmatpush1.msra.mxu0 0.0
  %888 = vmatprep.subr.mxu0 0.0
  %889 = vmatpush1.msra.mxu0 0.0
  %890 = vmatprep.subr.mxu0 0.0
  %891 = vmatpush1.msra.mxu0 0.0
  %892 = vmatprep.subr.mxu0 0.0
  %893 = vmatpush1.msra.mxu0 0.0
  %894 = vmatprep.subr.mxu0 0.0
  %895 = vmatpush1.msra.mxu0 0.0
  %896 = vmatprep.subr.mxu0 0.0
  %897 = vmatpush1.msra.mxu0 0.0
  %898 = vmatprep.subr.mxu0 0.0
  %899 = vmatpush1.msra.mxu0 0.0
  %900 = vmatprep.subr.mxu0 0.0
  %901 = vmatpush1.msra.mxu0 0.0
  %902 = vmatprep.subr.mxu0 0.0
  %903 = vmatpush1.msra.mxu0 0.0
  %904 = vmatprep.subr.mxu0 0.0
  %905 = vmatpush1.msra.mxu0 0.0
  %906 = vmatprep.subr.mxu0 0.0
  %907 = vmatpush1.msra.mxu0 0.0
  %908 = vmatprep.subr.mxu0 0.0
  %909 = vmatpush1.msra.mxu0 0.0
  %910 = vmatprep.subr.mxu0 0.0
  %911 = vmatpush1.msra.mxu0 0.0
  %912 = vmatprep.subr.mxu0 0.0
  %913 = vmatpush1.msra.mxu0 0.0
  %914 = vmatprep.subr.mxu0 0.0
  %915 = vmatpush1.msra.mxu0 0.0
  %916 = vmatprep.subr.mxu0 0.0
  %917 = vmatpush1.msra.mxu0 0.0
  %918 = vmatprep.subr.mxu0 0.0
  %919 = vmatpush1.msra.mxu0 0.0
  %920 = vmatprep.subr.mxu0 0.0
  %921 = vmatpush1.msra.mxu0 0.0
  %922 = vmatprep.subr.mxu0 0.0
  %923 = vmatpush1.msra.mxu0 0.0
  %924 = vmatprep.mubr.f32.mxu0 0.0
  %925 = vmatmul.mubr.f32.gmra.mrb[0].mxu0 %v858
  %v926 = vpop.f32.mrb[0].mxu0
  %v927 = vadd.f32 0.0, %v926
  %v928 = vpop.f32.mrb[0].mxu0
  %929 = vdwg.mxu0
  %v930 = vadd.f32 %v854, %v927
  %v931 = vxor.u32 %v930, 2147483648
  %v932 = vmul.f32 %v931, 1.442695
  %v933 = vpow.pop %v932
  %v934 = vadd.f32 %v933, 1.0
  %v935 = vrcp.pop %v934
  %v936 = vmul.f32 1.0, %v935
  %v937 = vtanh.pop %v930
  %v938 = vmul.f32 %v936, %v846
  %940 = vrot.lane.b32.xlu0 %v937, 64
  %v941 = vpop.permute.xlu0 %940
  %v943 = vmul.f32 %v936, %v941
  %945 = vrot.lane.b32.xlu0 %v943, 32
  %v946 = vpop.permute.xlu0 %945
  %v948 = vadd.f32 %v938, %v946
  %v949 = vtanh.pop %v948
  %951 = vrot.lane.b32.xlu0 %v949, 64
  %v952 = vpop.permute.xlu0 %951
  %v954 = vmul.f32 %v936, %v952
  %s955 = scalar_lea.vmem [#allocation2], 40
  %v956 = vld [vmem:[%s955] sm:$0xff]
  %958 = vrot.lane.b32.xlu0 %v954, 32
  %v959 = vpop.permute.xlu0 %958
  %v960 = vsel %vm448, %v959, 0
  %962 = vmatprep.subr.mxu0 0.0
  %963 = vmatpush1.msra.mxu0 %v443
  %964 = vmatprep.subr.mxu0 0.0
  %965 = vmatpush1.msra.mxu0 %v444
  %966 = vmatprep.subr.mxu0 0.0
  %967 = vmatpush1.msra.mxu0 %v445
  %968 = vmatprep.subr.mxu0 0.0
  %969 = vmatpush1.msra.mxu0 %v446
  %970 = vmatprep.subr.mxu0 0.0
  %971 = vmatpush1.msra.mxu0 0.0
  %972 = vmatprep.subr.mxu0 0.0
  %973 = vmatpush1.msra.mxu0 0.0
  %974 = vmatprep.subr.mxu0 0.0
  %975 = vmatpush1.msra.mxu0 0.0
  %976 = vmatprep.subr.mxu0 0.0
  %977 = vmatpush1.msra.mxu0 0.0
  %978 = vmatprep.subr.mxu0 0.0
  %979 = vmatpush1.msra.mxu0 0.0
  %980 = vmatprep.subr.mxu0 0.0
  %981 = vmatpush1.msra.mxu0 0.0
  %982 = vmatprep.subr.mxu0 0.0
  %983 = vmatpush1.msra.mxu0 0.0
  %984 = vmatprep.subr.mxu0 0.0
  %985 = vmatpush1.msra.mxu0 0.0
  %986 = vmatprep.subr.mxu0 0.0
  %987 = vmatpush1.msra.mxu0 0.0
  %988 = vmatprep.subr.mxu0 0.0
  %989 = vmatpush1.msra.mxu0 0.0
  %990 = vmatprep.subr.mxu0 0.0
  %991 = vmatpush1.msra.mxu0 0.0
  %992 = vmatprep.subr.mxu0 0.0
  %993 = vmatpush1.msra.mxu0 0.0
  %994 = vmatprep.subr.mxu0 0.0
  %995 = vmatpush1.msra.mxu0 0.0
  %996 = vmatprep.subr.mxu0 0.0
  %997 = vmatpush1.msra.mxu0 0.0
  %998 = vmatprep.subr.mxu0 0.0
  %999 = vmatpush1.msra.mxu0 0.0
  %1000 = vmatprep.subr.mxu0 0.0
  %1001 = vmatpush1.msra.mxu0 0.0
  %1002 = vmatprep.subr.mxu0 0.0
  %1003 = vmatpush1.msra.mxu0 0.0
  %1004 = vmatprep.subr.mxu0 0.0
  %1005 = vmatpush1.msra.mxu0 0.0
  %1006 = vmatprep.subr.mxu0 0.0
  %1007 = vmatpush1.msra.mxu0 0.0
  %1008 = vmatprep.subr.mxu0 0.0
  %1009 = vmatpush1.msra.mxu0 0.0
  %1010 = vmatprep.subr.mxu0 0.0
  %1011 = vmatpush1.msra.mxu0 0.0
  %1012 = vmatprep.subr.mxu0 0.0
  %1013 = vmatpush1.msra.mxu0 0.0
  %1014 = vmatprep.subr.mxu0 0.0
  %1015 = vmatpush1.msra.mxu0 0.0
  %1016 = vmatprep.subr.mxu0 0.0
  %1017 = vmatpush1.msra.mxu0 0.0
  %1018 = vmatprep.subr.mxu0 0.0
  %1019 = vmatpush1.msra.mxu0 0.0
  %1020 = vmatprep.subr.mxu0 0.0
  %1021 = vmatpush1.msra.mxu0 0.0
  %1022 = vmatprep.subr.mxu0 0.0
  %1023 = vmatpush1.msra.mxu0 0.0
  %1024 = vmatprep.subr.mxu0 0.0
  %1025 = vmatpush1.msra.mxu0 0.0
  %1026 = vmatprep.mubr.f32.mxu0 0.0
  %1027 = vmatmul.mubr.f32.gmra.mrb[0].mxu0 %v960
  %v1028 = vpop.f32.mrb[0].mxu0
  %v1029 = vadd.f32 0.0, %v1028
  %v1030 = vpop.f32.mrb[0].mxu0
  %1031 = vdwg.mxu0
  %v1032 = vadd.f32 %v956, %v1029
  %v1033 = vxor.u32 %v1032, 2147483648
  %v1034 = vmul.f32 %v1033, 1.442695
  %v1035 = vpow.pop %v1034
  %v1036 = vadd.f32 %v1035, 1.0
  %v1037 = vrcp.pop %v1036
  %v1038 = vmul.f32 1.0, %v1037
  %v1039 = vtanh.pop %v1032
  %v1040 = vmul.f32 %v1038, %v948
  %1042 = vrot.lane.b32.xlu0 %v1039, 64
  %v1043 = vpop.permute.xlu0 %1042
  %v1045 = vmul.f32 %v1038, %v1043
  %1047 = vrot.lane.b32.xlu0 %v1045, 32
  %v1048 = vpop.permute.xlu0 %1047
  %v1050 = vadd.f32 %v1040, %v1048
  %v1051 = vtanh.pop %v1050
  %1053 = vrot.lane.b32.xlu0 %v1051, 64
  %v1054 = vpop.permute.xlu0 %1053
  %v1056 = vmul.f32 %v1038, %v1054
  %s1057 = scalar_lea.vmem [#allocation2], 48
  %v1058 = vld [vmem:[%s1057] sm:$0xff]
  %1060 = vrot.lane.b32.xlu0 %v1056, 32
  %v1061 = vpop.permute.xlu0 %1060
  %v1062 = vsel %vm448, %v1061, 0
  %1064 = vmatprep.subr.mxu0 0.0
  %1065 = vmatpush1.msra.mxu0 %v443
  %1066 = vmatprep.subr.mxu0 0.0
  %1067 = vmatpush1.msra.mxu0 %v444
  %1068 = vmatprep.subr.mxu0 0.0
  %1069 = vmatpush1.msra.mxu0 %v445
  %1070 = vmatprep.subr.mxu0 0.0
  %1071 = vmatpush1.msra.mxu0 %v446
  %1072 = vmatprep.subr.mxu0 0.0
  %1073 = vmatpush1.msra.mxu0 0.0
  %1074 = vmatprep.subr.mxu0 0.0
  %1075 = vmatpush1.msra.mxu0 0.0
  %1076 = vmatprep.subr.mxu0 0.0
  %1077 = vmatpush1.msra.mxu0 0.0
  %1078 = vmatprep.subr.mxu0 0.0
  %1079 = vmatpush1.msra.mxu0 0.0
  %1080 = vmatprep.subr.mxu0 0.0
  %1081 = vmatpush1.msra.mxu0 0.0
  %1082 = vmatprep.subr.mxu0 0.0
  %1083 = vmatpush1.msra.mxu0 0.0
  %1084 = vmatprep.subr.mxu0 0.0
  %1085 = vmatpush1.msra.mxu0 0.0
  %1086 = vmatprep.subr.mxu0 0.0
  %1087 = vmatpush1.msra.mxu0 0.0
  %1088 = vmatprep.subr.mxu0 0.0
  %1089 = vmatpush1.msra.mxu0 0.0
  %1090 = vmatprep.subr.mxu0 0.0
  %1091 = vmatpush1.msra.mxu0 0.0
  %1092 = vmatprep.subr.mxu0 0.0
  %1093 = vmatpush1.msra.mxu0 0.0
  %1094 = vmatprep.subr.mxu0 0.0
  %1095 = vmatpush1.msra.mxu0 0.0
  %1096 = vmatprep.subr.mxu0 0.0
  %1097 = vmatpush1.msra.mxu0 0.0
  %1098 = vmatprep.subr.mxu0 0.0
  %1099 = vmatpush1.msra.mxu0 0.0
  %1100 = vmatprep.subr.mxu0 0.0
  %1101 = vmatpush1.msra.mxu0 0.0
  %1102 = vmatprep.subr.mxu0 0.0
  %1103 = vmatpush1.msra.mxu0 0.0
  %1104 = vmatprep.subr.mxu0 0.0
  %1105 = vmatpush1.msra.mxu0 0.0
  %1106 = vmatprep.subr.mxu0 0.0
  %1107 = vmatpush1.msra.mxu0 0.0
  %1108 = vmatprep.subr.mxu0 0.0
  %1109 = vmatpush1.msra.mxu0 0.0
  %1110 = vmatprep.subr.mxu0 0.0
  %1111 = vmatpush1.msra.mxu0 0.0
  %1112 = vmatprep.subr.mxu0 0.0
  %1113 = vmatpush1.msra.mxu0 0.0
  %1114 = vmatprep.subr.mxu0 0.0
  %1115 = vmatpush1.msra.mxu0 0.0
  %1116 = vmatprep.subr.mxu0 0.0
  %1117 = vmatpush1.msra.mxu0 0.0
  %1118 = vmatprep.subr.mxu0 0.0
  %1119 = vmatpush1.msra.mxu0 0.0
  %1120 = vmatprep.subr.mxu0 0.0
  %1121 = vmatpush1.msra.mxu0 0.0
  %1122 = vmatprep.subr.mxu0 0.0
  %1123 = vmatpush1.msra.mxu0 0.0
  %1124 = vmatprep.subr.mxu0 0.0
  %1125 = vmatpush1.msra.mxu0 0.0
  %1126 = vmatprep.subr.mxu0 0.0
  %1127 = vmatpush1.msra.mxu0 0.0
  %1128 = vmatprep.mubr.f32.mxu0 0.0
  %1129 = vmatmul.mubr.f32.gmra.mrb[0].mxu0 %v1062
  %v1130 = vpop.f32.mrb[0].mxu0
  %v1131 = vadd.f32 0.0, %v1130
  %v1132 = vpop.f32.mrb[0].mxu0
  %1133 = vdwg.mxu0
  %v1134 = vadd.f32 %v1058, %v1131
  %v1135 = vxor.u32 %v1134, 2147483648
  %v1136 = vmul.f32 %v1135, 1.442695
  %v1137 = vpow.pop %v1136
  %v1138 = vadd.f32 %v1137, 1.0
  %v1139 = vrcp.pop %v1138
  %v1140 = vmul.f32 1.0, %v1139
  %v1141 = vtanh.pop %v1134
  %v1142 = vmul.f32 %v1140, %v1050
  %1144 = vrot.lane.b32.xlu0 %v1141, 64
  %v1145 = vpop.permute.xlu0 %1144
  %v1147 = vmul.f32 %v1140, %v1145
  %1149 = vrot.lane.b32.xlu0 %v1147, 32
  %v1150 = vpop.permute.xlu0 %1149
  %v1152 = vadd.f32 %v1142, %v1150
  %v1153 = vtanh.pop %v1152
  %1155 = vrot.lane.b32.xlu0 %v1153, 64
  %v1156 = vpop.permute.xlu0 %1155
  %v1158 = vmul.f32 %v1140, %v1156
  %s1159 = scalar_lea.vmem [#allocation2], 56
  %v1160 = vld [vmem:[%s1159] sm:$0xff]
  %1162 = vrot.lane.b32.xlu0 %v1158, 32
  %v1163 = vpop.permute.xlu0 %1162
  %v1164 = vsel %vm448, %v1163, 0
  %1166 = vmatprep.subr.mxu0 0.0
  %1167 = vmatpush1.msra.mxu0 %v443
  %1168 = vmatprep.subr.mxu0 0.0
  %1169 = vmatpush1.msra.mxu0 %v444
  %1170 = vmatprep.subr.mxu0 0.0
  %1171 = vmatpush1.msra.mxu0 %v445
  %1172 = vmatprep.subr.mxu0 0.0
  %1173 = vmatpush1.msra.mxu0 %v446
  %1174 = vmatprep.subr.mxu0 0.0
  %1175 = vmatpush1.msra.mxu0 0.0
  %1176 = vmatprep.subr.mxu0 0.0
  %1177 = vmatpush1.msra.mxu0 0.0
  %1178 = vmatprep.subr.mxu0 0.0
  %1179 = vmatpush1.msra.mxu0 0.0
  %1180 = vmatprep.subr.mxu0 0.0
  %1181 = vmatpush1.msra.mxu0 0.0
  %1182 = vmatprep.subr.mxu0 0.0
  %1183 = vmatpush1.msra.mxu0 0.0
  %1184 = vmatprep.subr.mxu0 0.0
  %1185 = vmatpush1.msra.mxu0 0.0
  %1186 = vmatprep.subr.mxu0 0.0
  %1187 = vmatpush1.msra.mxu0 0.0
  %1188 = vmatprep.subr.mxu0 0.0
  %1189 = vmatpush1.msra.mxu0 0.0
  %1190 = vmatprep.subr.mxu0 0.0
  %1191 = vmatpush1.msra.mxu0 0.0
  %1192 = vmatprep.subr.mxu0 0.0
  %1193 = vmatpush1.msra.mxu0 0.0
  %1194 = vmatprep.subr.mxu0 0.0
  %1195 = vmatpush1.msra.mxu0 0.0
  %1196 = vmatprep.subr.mxu0 0.0
  %1197 = vmatpush1.msra.mxu0 0.0
  %1198 = vmatprep.subr.mxu0 0.0
  %1199 = vmatpush1.msra.mxu0 0.0
  %1200 = vmatprep.subr.mxu0 0.0
  %1201 = vmatpush1.msra.mxu0 0.0
  %1202 = vmatprep.subr.mxu0 0.0
  %1203 = vmatpush1.msra.mxu0 0.0
  %1204 = vmatprep.subr.mxu0 0.0
  %1205 = vmatpush1.msra.mxu0 0.0
  %1206 = vmatprep.subr.mxu0 0.0
  %1207 = vmatpush1.msra.mxu0 0.0
  %1208 = vmatprep.subr.mxu0 0.0
  %1209 = vmatpush1.msra.mxu0 0.0
  %1210 = vmatprep.subr.mxu0 0.0
  %1211 = vmatpush1.msra.mxu0 0.0
  %1212 = vmatprep.subr.mxu0 0.0
  %1213 = vmatpush1.msra.mxu0 0.0
  %1214 = vmatprep.subr.mxu0 0.0
  %1215 = vmatpush1.msra.mxu0 0.0
  %1216 = vmatprep.subr.mxu0 0.0
  %1217 = vmatpush1.msra.mxu0 0.0
  %1218 = vmatprep.subr.mxu0 0.0
  %1219 = vmatpush1.msra.mxu0 0.0
  %1220 = vmatprep.subr.mxu0 0.0
  %1221 = vmatpush1.msra.mxu0 0.0
  %1222 = vmatprep.subr.mxu0 0.0
  %1223 = vmatpush1.msra.mxu0 0.0
  %1224 = vmatprep.subr.mxu0 0.0
  %1225 = vmatpush1.msra.mxu0 0.0
  %1226 = vmatprep.subr.mxu0 0.0
  %1227 = vmatpush1.msra.mxu0 0.0
  %1228 = vmatprep.subr.mxu0 0.0
  %1229 = vmatpush1.msra.mxu0 0.0
  %1230 = vmatprep.mubr.f32.mxu0 0.0
  %1231 = vmatmul.mubr.f32.gmra.mrb[0].mxu0 %v1164
  %v1232 = vpop.f32.mrb[0].mxu0
  %v1233 = vadd.f32 0.0, %v1232
  %v1234 = vpop.f32.mrb[0].mxu0
  %1235 = vdwg.mxu0
  %v1236 = vadd.f32 %v1160, %v1233
  %v1237 = vxor.u32 %v1236, 2147483648
  %v1238 = vmul.f32 %v1237, 1.442695
  %v1239 = vpow.pop %v1238
  %v1240 = vadd.f32 %v1239, 1.0
  %v1241 = vrcp.pop %v1240
  %v1242 = vmul.f32 1.0, %v1241
  %v1243 = vtanh.pop %v1236
  %v1244 = vmul.f32 %v1242, %v1152
  %1246 = vrot.lane.b32.xlu0 %v1243, 64
  %v1247 = vpop.permute.xlu0 %1246
  %v1249 = vmul.f32 %v1242, %v1247
  %1251 = vrot.lane.b32.xlu0 %v1249, 32
  %v1252 = vpop.permute.xlu0 %1251
  %v1254 = vadd.f32 %v1244, %v1252
  %v1255 = vtanh.pop %v1254
  %1257 = vrot.lane.b32.xlu0 %v1255, 64
  %v1258 = vpop.permute.xlu0 %1257
  %v1260 = vmul.f32 %v1242, %v1258
  %v1261 = vld [vmem:[%s1] sm:$0xff]
  %v1262 = vld [vmem:[%s6] sm:$0xff]
  %v1263 = vld [vmem:[%s6 + $0x8] sm:$0xff]
  %v1264 = vld [vmem:[%s6 + $0x10] sm:$0x1]
  %vm1265 = vcmask 138240
  %v1267 = vsel %vm1265, %v1261, 0
  %vm1269 = vcmask 1040384
  %v1271 = vsel %vm1269, %v1264, 0
  %1273 = vmatprep.subr.mxu0 0.0
  %1274 = vmatpush1.msra.mxu0 %v1262
  %1275 = vmatprep.subr.mxu0 0.0
  %1276 = vmatpush1.msra.mxu0 %v1263
  %1277 = vmatprep.subr.mxu0 0.0
  %1278 = vmatpush1.msra.mxu0 %v1271
  %1279 = vmatprep.subr.mxu0 0.0
  %1280 = vmatpush1.msra.mxu0 0.0
  %1281 = vmatprep.subr.mxu0 0.0
  %1282 = vmatpush1.msra.mxu0 0.0
  %1283 = vmatprep.subr.mxu0 0.0
  %1284 = vmatpush1.msra.mxu0 0.0
  %1285 = vmatprep.subr.mxu0 0.0
  %1286 = vmatpush1.msra.mxu0 0.0
  %1287 = vmatprep.subr.mxu0 0.0
  %1288 = vmatpush1.msra.mxu0 0.0
  %1289 = vmatprep.subr.mxu0 0.0
  %1290 = vmatpush1.msra.mxu0 0.0
  %1291 = vmatprep.subr.mxu0 0.0
  %1292 = vmatpush1.msra.mxu0 0.0
  %1293 = vmatprep.subr.mxu0 0.0
  %1294 = vmatpush1.msra.mxu0 0.0
  %1295 = vmatprep.subr.mxu0 0.0
  %1296 = vmatpush1.msra.mxu0 0.0
  %1297 = vmatprep.subr.mxu0 0.0
  %1298 = vmatpush1.msra.mxu0 0.0
  %1299 = vmatprep.subr.mxu0 0.0
  %1300 = vmatpush1.msra.mxu0 0.0
  %1301 = vmatprep.subr.mxu0 0.0
  %1302 = vmatpush1.msra.mxu0 0.0
  %1303 = vmatprep.subr.mxu0 0.0
  %1304 = vmatpush1.msra.mxu0 0.0
  %1305 = vmatprep.subr.mxu0 0.0
  %1306 = vmatpush1.msra.mxu0 0.0
  %1307 = vmatprep.subr.mxu0 0.0
  %1308 = vmatpush1.msra.mxu0 0.0
  %1309 = vmatprep.subr.mxu0 0.0
  %1310 = vmatpush1.msra.mxu0 0.0
  %1311 = vmatprep.subr.mxu0 0.0
  %1312 = vmatpush1.msra.mxu0 0.0
  %1313 = vmatprep.subr.mxu0 0.0
  %1314 = vmatpush1.msra.mxu0 0.0
  %1315 = vmatprep.subr.mxu0 0.0
  %1316 = vmatpush1.msra.mxu0 0.0
  %1317 = vmatprep.subr.mxu0 0.0
  %1318 = vmatpush1.msra.mxu0 0.0
  %1319 = vmatprep.subr.mxu0 0.0
  %1320 = vmatpush1.msra.mxu0 0.0
  %1321 = vmatprep.subr.mxu0 0.0
  %1322 = vmatpush1.msra.mxu0 0.0
  %1323 = vmatprep.subr.mxu0 0.0
  %1324 = vmatpush1.msra.mxu0 0.0
  %1325 = vmatprep.subr.mxu0 0.0
  %1326 = vmatpush1.msra.mxu0 0.0
  %1327 = vmatprep.subr.mxu0 0.0
  %1328 = vmatpush1.msra.mxu0 0.0
  %1329 = vmatprep.subr.mxu0 0.0
  %1330 = vmatpush1.msra.mxu0 0.0
  %1331 = vmatprep.subr.mxu0 0.0
  %1332 = vmatpush1.msra.mxu0 0.0
  %1333 = vmatprep.subr.mxu0 0.0
  %1334 = vmatpush1.msra.mxu0 0.0
  %1335 = vmatprep.subr.mxu0 0.0
  %1336 = vmatpush1.msra.mxu0 0.0
  %1337 = vmatprep.mubr.f32.mxu0 0.0
  %1338 = vmatmul.mubr.f32.gmra.mrb[0].mxu0 %v1267
  %v1339 = vpop.f32.mrb[0].mxu0
  %v1340 = vadd.f32 0.0, %v1339
  %v1341 = vpop.f32.mrb[0].mxu0
  %1342 = vdwg.mxu0
  %v1343 = vtanh.pop %v1340
  %v1344 = vld [vmem:[%s7] sm:$0xff]
  %v1345 = vld [vmem:[%s7 + $0x8] sm:$0xff]
  %v1346 = vld [vmem:[%s7 + $0x10] sm:$0xff]
  %v1347 = vld [vmem:[%s7 + $0x18] sm:$0xff]
  %v1348 = vld [vmem:[%s8] sm:$0xff]
  %v1349 = vld [vmem:[%s8 + $0x8] sm:$0xff]
  %v1350 = vld [vmem:[%s8 + $0x10] sm:$0xff]
  %v1351 = vld [vmem:[%s8 + $0x18] sm:$0xff]
  %v1353 = vsel %vm448, %v1343, 0
  %1355 = vmatprep.subr.mxu0 0.0
  %1356 = vmatpush1.msra.mxu0 %v1348
  %1357 = vmatprep.subr.mxu0 0.0
  %1358 = vmatpush1.msra.mxu0 %v1349
  %1359 = vmatprep.subr.mxu0 0.0
  %1360 = vmatpush1.msra.mxu0 %v1350
  %1361 = vmatprep.subr.mxu0 0.0
  %1362 = vmatpush1.msra.mxu0 %v1351
  %1363 = vmatprep.subr.mxu0 0.0
  %1364 = vmatpush1.msra.mxu0 0.0
  %1365 = vmatprep.subr.mxu0 0.0
  %1366 = vmatpush1.msra.mxu0 0.0
  %1367 = vmatprep.subr.mxu0 0.0
  %1368 = vmatpush1.msra.mxu0 0.0
  %1369 = vmatprep.subr.mxu0 0.0
  %1370 = vmatpush1.msra.mxu0 0.0
  %1371 = vmatprep.subr.mxu0 0.0
  %1372 = vmatpush1.msra.mxu0 0.0
  %1373 = vmatprep.subr.mxu0 0.0
  %1374 = vmatpush1.msra.mxu0 0.0
  %1375 = vmatprep.subr.mxu0 0.0
  %1376 = vmatpush1.msra.mxu0 0.0
  %1377 = vmatprep.subr.mxu0 0.0
  %1378 = vmatpush1.msra.mxu0 0.0
  %1379 = vmatprep.subr.mxu0 0.0
  %1380 = vmatpush1.msra.mxu0 0.0
  %1381 = vmatprep.subr.mxu0 0.0
  %1382 = vmatpush1.msra.mxu0 0.0
  %1383 = vmatprep.subr.mxu0 0.0
  %1384 = vmatpush1.msra.mxu0 0.0
  %1385 = vmatprep.subr.mxu0 0.0
  %1386 = vmatpush1.msra.mxu0 0.0
  %1387 = vmatprep.subr.mxu0 0.0
  %1388 = vmatpush1.msra.mxu0 0.0
  %1389 = vmatprep.subr.mxu0 0.0
  %1390 = vmatpush1.msra.mxu0 0.0
  %1391 = vmatprep.subr.mxu0 0.0
  %1392 = vmatpush1.msra.mxu0 0.0
  %1393 = vmatprep.subr.mxu0 0.0
  %1394 = vmatpush1.msra.mxu0 0.0
  %1395 = vmatprep.subr.mxu0 0.0
  %1396 = vmatpush1.msra.mxu0 0.0
  %1397 = vmatprep.subr.mxu0 0.0
  %1398 = vmatpush1.msra.mxu0 0.0
  %1399 = vmatprep.subr.mxu0 0.0
  %1400 = vmatpush1.msra.mxu0 0.0
  %1401 = vmatprep.subr.mxu0 0.0
  %1402 = vmatpush1.msra.mxu0 0.0
  %1403 = vmatprep.subr.mxu0 0.0
  %1404 = vmatpush1.msra.mxu0 0.0
  %1405 = vmatprep.subr.mxu0 0.0
  %1406 = vmatpush1.msra.mxu0 0.0
  %1407 = vmatprep.subr.mxu0 0.0
  %1408 = vmatpush1.msra.mxu0 0.0
  %1409 = vmatprep.subr.mxu0 0.0
  %1410 = vmatpush1.msra.mxu0 0.0
  %1411 = vmatprep.subr.mxu0 0.0
  %1412 = vmatpush1.msra.mxu0 0.0
  %1413 = vmatprep.subr.mxu0 0.0
  %1414 = vmatpush1.msra.mxu0 0.0
  %1415 = vmatprep.subr.mxu0 0.0
  %1416 = vmatpush1.msra.mxu0 0.0
  %1417 = vmatprep.subr.mxu0 0.0
  %1418 = vmatpush1.msra.mxu0 0.0
  %1419 = vmatprep.mubr.f32.mxu0 0.0
  %1420 = vmatmul.mubr.f32.gmra.mrb[0].mxu0 %v1353
  %v1421 = vpop.f32.mrb[0].mxu0
  %v1422 = vadd.f32 0.0, %v1421
  %v1423 = vpop.f32.mrb[0].mxu0
  %1424 = vdwg.mxu0
  %1426 = vrot.lane.b32.xlu0 %v1260, 32
  %v1427 = vpop.permute.xlu0 %1426
  %v1428 = vsel %vm448, %v1427, 0
  %1430 = vmatprep.subr.mxu0 0.0
  %1431 = vmatpush1.msra.mxu0 %v1344
  %1432 = vmatprep.subr.mxu0 0.0
  %1433 = vmatpush1.msra.mxu0 %v1345
  %1434 = vmatprep.subr.mxu0 0.0
  %1435 = vmatpush1.msra.mxu0 %v1346
  %1436 = vmatprep.subr.mxu0 0.0
  %1437 = vmatpush1.msra.mxu0 %v1347
  %1438 = vmatprep.subr.mxu0 0.0
  %1439 = vmatpush1.msra.mxu0 0.0
  %1440 = vmatprep.subr.mxu0 0.0
  %1441 = vmatpush1.msra.mxu0 0.0
  %1442 = vmatprep.subr.mxu0 0.0
  %1443 = vmatpush1.msra.mxu0 0.0
  %1444 = vmatprep.subr.mxu0 0.0
  %1445 = vmatpush1.msra.mxu0 0.0
  %1446 = vmatprep.subr.mxu0 0.0
  %1447 = vmatpush1.msra.mxu0 0.0
  %1448 = vmatprep.subr.mxu0 0.0
  %1449 = vmatpush1.msra.mxu0 0.0
  %1450 = vmatprep.subr.mxu0 0.0
  %1451 = vmatpush1.msra.mxu0 0.0
  %1452 = vmatprep.subr.mxu0 0.0
  %1453 = vmatpush1.msra.mxu0 0.0
  %1454 = vmatprep.subr.mxu0 0.0
  %1455 = vmatpush1.msra.mxu0 0.0
  %1456 = vmatprep.subr.mxu0 0.0
  %1457 = vmatpush1.msra.mxu0 0.0
  %1458 = vmatprep.subr.mxu0 0.0
  %1459 = vmatpush1.msra.mxu0 0.0
  %1460 = vmatprep.subr.mxu0 0.0
  %1461 = vmatpush1.msra.mxu0 0.0
  %1462 = vmatprep.subr.mxu0 0.0
  %1463 = vmatpush1.msra.mxu0 0.0
  %1464 = vmatprep.subr.mxu0 0.0
  %1465 = vmatpush1.msra.mxu0 0.0
  %1466 = vmatprep.subr.mxu0 0.0
  %1467 = vmatpush1.msra.mxu0 0.0
  %1468 = vmatprep.subr.mxu0 0.0
  %1469 = vmatpush1.msra.mxu0 0.0
  %1470 = vmatprep.subr.mxu0 0.0
  %1471 = vmatpush1.msra.mxu0 0.0
  %1472 = vmatprep.subr.mxu0 0.0
  %1473 = vmatpush1.msra.mxu0 0.0
  %1474 = vmatprep.subr.mxu0 0.0
  %1475 = vmatpush1.msra.mxu0 0.0
  %1476 = vmatprep.subr.mxu0 0.0
  %1477 = vmatpush1.msra.mxu0 0.0
  %1478 = vmatprep.subr.mxu0 0.0
  %1479 = vmatpush1.msra.mxu0 0.0
  %1480 = vmatprep.subr.mxu0 0.0
  %1481 = vmatpush1.msra.mxu0 0.0
  %1482 = vmatprep.subr.mxu0 0.0
  %1483 = vmatpush1.msra.mxu0 0.0
  %1484 = vmatprep.subr.mxu0 0.0
  %1485 = vmatpush1.msra.mxu0 0.0
  %1486 = vmatprep.subr.mxu0 0.0
  %1487 = vmatpush1.msra.mxu0 0.0
  %1488 = vmatprep.subr.mxu0 0.0
  %1489 = vmatpush1.msra.mxu0 0.0
  %1490 = vmatprep.subr.mxu0 0.0
  %1491 = vmatpush1.msra.mxu0 0.0
  %1492 = vmatprep.subr.mxu0 0.0
  %1493 = vmatpush1.msra.mxu0 0.0
  %1494 = vmatprep.mubr.f32.mxu0 0.0
  %1495 = vmatmul.mubr.f32.gmra.mrb[0].mxu0 %v1428
  %v1496 = vpop.f32.mrb[0].mxu0
  %v1497 = vadd.f32 %v1422, %v1496
  %v1498 = vpop.f32.mrb[0].mxu0
  %1499 = vdwg.mxu0
  %v1500 = vld [vmem:[%s9] sm:$0x1]
  %v1502 = vlaneseq
  %v1503 = vshrl.u32 %v1502, 7
  %v1504 = vsub.s32 0, %v1503
  %v1505 = vrot.slane %v1500, %v1504
  %v1507 = vadd.f32 %v1497, %v1505
  %v1508 = vxor.u32 %v1507, 2147483648
  %v1509 = vmul.f32 %v1508, 1.442695
  %v1510 = vpow.pop %v1509
  %v1511 = vadd.f32 %v1510, 1.0
  %v1512 = vrcp.pop %v1511
  %v1513 = vmul.f32 1.0, %v1512
  %v1514 = vld [vmem:[%s10] sm:$0xff]
  %v1515 = vld [vmem:[%s10 + $0x8] sm:$0xff]
  %v1516 = vld [vmem:[%s10 + $0x10] sm:$0xff]
  %v1517 = vld [vmem:[%s10 + $0x18] sm:$0xff]
  %v1518 = vld [vmem:[%s10 + $0x20] sm:$0xff]
  %v1519 = vld [vmem:[%s11] sm:$0xff]
  %v1520 = vld [vmem:[%s11 + $0x8] sm:$0xff]
  %v1521 = vld [vmem:[%s11 + $0x10] sm:$0xff]
  %v1522 = vld [vmem:[%s11 + $0x18] sm:$0xff]
  %1523 = vmatprep.subr.mxu0 0.0
  %1524 = vmatpush1.msra.mxu0 %v1519
  %1525 = vmatprep.subr.mxu0 0.0
  %1526 = vmatpush1.msra.mxu0 %v1520
  %1527 = vmatprep.subr.mxu0 0.0
  %1528 = vmatpush1.msra.mxu0 %v1521
  %1529 = vmatprep.subr.mxu0 0.0
  %1530 = vmatpush1.msra.mxu0 %v1522
  %1531 = vmatprep.subr.mxu0 0.0
  %1532 = vmatpush1.msra.mxu0 0.0
  %1533 = vmatprep.subr.mxu0 0.0
  %1534 = vmatpush1.msra.mxu0 0.0
  %1535 = vmatprep.subr.mxu0 0.0
  %1536 = vmatpush1.msra.mxu0 0.0
  %1537 = vmatprep.subr.mxu0 0.0
  %1538 = vmatpush1.msra.mxu0 0.0
  %1539 = vmatprep.subr.mxu0 0.0
  %1540 = vmatpush1.msra.mxu0 0.0
  %1541 = vmatprep.subr.mxu0 0.0
  %1542 = vmatpush1.msra.mxu0 0.0
  %1543 = vmatprep.subr.mxu0 0.0
  %1544 = vmatpush1.msra.mxu0 0.0
  %1545 = vmatprep.subr.mxu0 0.0
  %1546 = vmatpush1.msra.mxu0 0.0
  %1547 = vmatprep.subr.mxu0 0.0
  %1548 = vmatpush1.msra.mxu0 0.0
  %1549 = vmatprep.subr.mxu0 0.0
  %1550 = vmatpush1.msra.mxu0 0.0
  %1551 = vmatprep.subr.mxu0 0.0
  %1552 = vmatpush1.msra.mxu0 0.0
  %1553 = vmatprep.subr.mxu0 0.0
  %1554 = vmatpush1.msra.mxu0 0.0
  %1555 = vmatprep.subr.mxu0 0.0
  %1556 = vmatpush1.msra.mxu0 0.0
  %1557 = vmatprep.subr.mxu0 0.0
  %1558 = vmatpush1.msra.mxu0 0.0
  %1559 = vmatprep.subr.mxu0 0.0
  %1560 = vmatpush1.msra.mxu0 0.0
  %1561 = vmatprep.subr.mxu0 0.0
  %1562 = vmatpush1.msra.mxu0 0.0
  %1563 = vmatprep.subr.mxu0 0.0
  %1564 = vmatpush1.msra.mxu0 0.0
  %1565 = vmatprep.subr.mxu0 0.0
  %1566 = vmatpush1.msra.mxu0 0.0
  %1567 = vmatprep.subr.mxu0 0.0
  %1568 = vmatpush1.msra.mxu0 0.0
  %1569 = vmatprep.subr.mxu0 0.0
  %1570 = vmatpush1.msra.mxu0 0.0
  %1571 = vmatprep.subr.mxu0 0.0
  %1572 = vmatpush1.msra.mxu0 0.0
  %1573 = vmatprep.subr.mxu0 0.0
  %1574 = vmatpush1.msra.mxu0 0.0
  %1575 = vmatprep.subr.mxu0 0.0
  %1576 = vmatpush1.msra.mxu0 0.0
  %1577 = vmatprep.subr.mxu0 0.0
  %1578 = vmatpush1.msra.mxu0 0.0
  %1579 = vmatprep.subr.mxu0 0.0
  %1580 = vmatpush1.msra.mxu0 0.0
  %1581 = vmatprep.subr.mxu0 0.0
  %1582 = vmatpush1.msra.mxu0 0.0
  %1583 = vmatprep.subr.mxu0 0.0
  %1584 = vmatpush1.msra.mxu0 0.0
  %1585 = vmatprep.subr.mxu0 0.0
  %1586 = vmatpush1.msra.mxu0 0.0
  %1587 = vmatprep.mubr.f32.mxu0 0.0
  %1588 = vmatmul.mubr.f32.gmra.mrb[0].mxu0 %v1353
  %v1589 = vpop.f32.mrb[0].mxu0
  %v1590 = vadd.f32 0.0, %v1589
  %v1591 = vpop.f32.mrb[0].mxu0
  %1592 = vdwg.mxu0
  %vm1593 = vcmask 326656
  %v1595 = vsel %vm1593, %v1513, 0
  %1597 = vmatprep.subr.mxu0 0.0
  %1598 = vmatpush1.msra.mxu0 %v1514
  %1599 = vmatprep.subr.mxu0 0.0
  %1600 = vmatpush1.msra.mxu0 %v1515
  %1601 = vmatprep.subr.mxu0 0.0
  %1602 = vmatpush1.msra.mxu0 %v1516
  %1603 = vmatprep.subr.mxu0 0.0
  %1604 = vmatpush1.msra.mxu0 %v1517
  %1605 = vmatprep.subr.mxu0 0.0
  %1606 = vmatpush1.msra.mxu0 %v1518
  %1607 = vmatprep.subr.mxu0 0.0
  %1608 = vmatpush1.msra.mxu0 0.0
  %1609 = vmatprep.subr.mxu0 0.0
  %1610 = vmatpush1.msra.mxu0 0.0
  %1611 = vmatprep.subr.mxu0 0.0
  %1612 = vmatpush1.msra.mxu0 0.0
  %1613 = vmatprep.subr.mxu0 0.0
  %1614 = vmatpush1.msra.mxu0 0.0
  %1615 = vmatprep.subr.mxu0 0.0
  %1616 = vmatpush1.msra.mxu0 0.0
  %1617 = vmatprep.subr.mxu0 0.0
  %1618 = vmatpush1.msra.mxu0 0.0
  %1619 = vmatprep.subr.mxu0 0.0
  %1620 = vmatpush1.msra.mxu0 0.0
  %1621 = vmatprep.subr.mxu0 0.0
  %1622 = vmatpush1.msra.mxu0 0.0
  %1623 = vmatprep.subr.mxu0 0.0
  %1624 = vmatpush1.msra.mxu0 0.0
  %1625 = vmatprep.subr.mxu0 0.0
  %1626 = vmatpush1.msra.mxu0 0.0
  %1627 = vmatprep.subr.mxu0 0.0
  %1628 = vmatpush1.msra.mxu0 0.0
  %1629 = vmatprep.subr.mxu0 0.0
  %1630 = vmatpush1.msra.mxu0 0.0
  %1631 = vmatprep.subr.mxu0 0.0
  %1632 = vmatpush1.msra.mxu0 0.0
  %1633 = vmatprep.subr.mxu0 0.0
  %1634 = vmatpush1.msra.mxu0 0.0
  %1635 = vmatprep.subr.mxu0 0.0
  %1636 = vmatpush1.msra.mxu0 0.0
  %1637 = vmatprep.subr.mxu0 0.0
  %1638 = vmatpush1.msra.mxu0 0.0
  %1639 = vmatprep.subr.mxu0 0.0
  %1640 = vmatpush1.msra.mxu0 0.0
  %1641 = vmatprep.subr.mxu0 0.0
  %1642 = vmatpush1.msra.mxu0 0.0
  %1643 = vmatprep.subr.mxu0 0.0
  %1644 = vmatpush1.msra.mxu0 0.0
  %1645 = vmatprep.subr.mxu0 0.0
  %1646 = vmatpush1.msra.mxu0 0.0
  %1647 = vmatprep.subr.mxu0 0.0
  %1648 = vmatpush1.msra.mxu0 0.0
  %1649 = vmatprep.subr.mxu0 0.0
  %1650 = vmatpush1.msra.mxu0 0.0
  %1651 = vmatprep.subr.mxu0 0.0
  %1652 = vmatpush1.msra.mxu0 0.0
  %1653 = vmatprep.subr.mxu0 0.0
  %1654 = vmatpush1.msra.mxu0 0.0
  %1655 = vmatprep.subr.mxu0 0.0
  %1656 = vmatpush1.msra.mxu0 0.0
  %1657 = vmatprep.subr.mxu0 0.0
  %1658 = vmatpush1.msra.mxu0 0.0
  %1659 = vmatprep.subr.mxu0 0.0
  %1660 = vmatpush1.msra.mxu0 0.0
  %1661 = vmatprep.mubr.f32.mxu0 0.0
  %1662 = vmatmul.mubr.f32.gmra.mrb[0].mxu0 %v1595
  %v1663 = vpop.f32.mrb[0].mxu0
  %v1664 = vadd.f32 %v1590, %v1663
  %v1665 = vpop.f32.mrb[0].mxu0
  %1666 = vdwg.mxu0
  %v1667 = vld [vmem:[%s12] sm:$0x1]
  %v1669 = vlaneseq
  %v1670 = vshrl.u32 %v1669, 7
  %v1671 = vsub.s32 0, %v1670
  %v1672 = vrot.slane %v1667, %v1671
  %v1674 = vadd.f32 %v1664, %v1672
  %1675 = vst [vmem:[%s13] sm:$0xff] %v1674
  // Predicated region
  $region54: #{mq_rnn_forward.1} parent=0 // pred_check
    _
  $region55: #{mq_rnn_forward.1} parent=0 // pred_check_branch
    %1677 = sbr.rel (0) target = $region57
  $region56: #{mq_rnn_forward.1} parent=0 // pred_region
    _
  $region57: #{mq_rnn_forward.1} parent=0 // pred_fallthru
    _
  // Predicated region
  $region58: #{mq_rnn_forward.1} parent=0 // pred_check
    _
  $region59: #{mq_rnn_forward.1} parent=0 // pred_check_branch
    %1679 = sbr.rel (0) target = $region61
  $region60: #{mq_rnn_forward.1} parent=0 // pred_region
    _
  $region61: #{mq_rnn_forward.1} parent=0 // pred_fallthru
    _

</llo_original>
